<compile_context>
chip_gen: v7x
topology: tpu7x:2x2x1
jax: 0.10.0
libtpu: 0.0.40
codegen_flags: <defaults>
</compile_context>

<pallas_src>
import functools

import jax
import jax.numpy as jnp
import numpy as np
from jax import lax
from jax.experimental import pallas as pl
from jax.experimental.pallas import tpu as pltpu

BN_EPS = 1e-5


# --------------------------------------------------------------------------
# Fused Conv2d('same') + BatchNorm(eval) + ReLU + MaxPool2d(2) kernel.
# Grid = (batch, H-tiles).  Inside a grid step the kernel loops over RH-row
# chunks of the output: per chunk it accumulates the KH tap matmuls
# (RH*W, K) @ (K, Cout) in a small f32 value, applies BN+ReLU, pools 2x2 and
# stores — keeping the accumulator in vregs instead of VMEM.
# --------------------------------------------------------------------------
def _conv_bn_relu_pool_kernel(x_ref, w_ref, scale_ref, shift_ref, o_ref, *,
                              KH, RH):
    # x_ref:     (1, 1, TH+KH-1, W, K)     bf16 tap-folded, halo'd input tile
    # w_ref:     (KH, K, Cout)             bf16 tap-folded conv weights
    # scale_ref: (1, Cout)                 f32 folded BN scale
    # shift_ref: (1, Cout)                 f32 folded BN shift
    # o_ref:     (1, 1, TH//2, W//2, Cout) bf16 pooled output tile
    THp, W, K = x_ref.shape[2], x_ref.shape[3], x_ref.shape[4]
    TH = THp - (KH - 1)
    Cout = w_ref.shape[2]
    Wo = W // 2
    RHo = RH // 2
    n_chunks = TH // RH

    # Hoist BN params out of the chunk loop (no per-iteration broadcasts).
    scale = scale_ref[...]                                 # (1, Cout) f32
    shift = shift_ref[...]                                 # (1, Cout) f32

    @pl.loop(0, n_chunks)
    def _(c):
        row0 = c * RH
        # Small per-chunk accumulator (≈ RH*W x 128 lanes of f32 -> ~32 vregs).
        acc = jnp.zeros((RH * W, Cout), jnp.float32)
        for kh in range(KH):                               # static unroll
            # H-axis (major-dim, untiled) slice -> cheap; the reshape merges
            # (RH, W) into the sublane axis (W is a multiple of 16, so it is
            # layout-preserving for bf16).
            patch = x_ref[0, 0, pl.ds(row0 + kh, RH), :, :].reshape(RH * W, K)
            acc = acc + jnp.dot(patch, w_ref[kh],
                                preferred_element_type=jnp.float32)

        # BN(eval) + bias + ReLU in f32 (v5e VPU has no bf16).
        y = jnp.maximum(acc * scale + shift, 0.0)

        # MaxPool2d(2) within the chunk (RH is even): H pairs then W pairs.
        y = y.reshape(RHo, 2, W, Cout)
        y = jnp.maximum(y[:, 0], y[:, 1])                  # (RHo, W, Cout)
        y = y.reshape(RHo, Wo, 2, Cout)
        y = jnp.maximum(y[:, :, 0], y[:, :, 1])            # (RHo, Wo, Cout)

        o_ref[0, 0, pl.ds(c * RHo, RHo), :, :] = y.astype(o_ref.dtype)


def conv_bn_relu_pool(x_nhwc, w_hwio, scale, shift, *, pad, h_tile=128,
                      chunk_pixels=256):
    """Fused Conv2d('same', stride 1) + BN(eval) + ReLU + MaxPool2d(2)."""
    N, H, W, Cin = x_nhwc.shape
    KH, KW, _, Cout = w_hwio.shape
    assert KH == KW and 2 * pad == KH - 1, "kernel assumes odd 'same' padding"
    assert H % 2 == 0 and W % 2 == 0, "MaxPool2d(2) requires even spatial dims"

    TH = min(h_tile, H)                  # output rows per grid step (pre-pool)
    assert H % TH == 0 and TH % 2 == 0
    n_ht = H // TH
    Ho, Wo = H // 2, W // 2

    # Rows per in-kernel chunk: target ~256 output pixels per chunk so the
    # f32 accumulator stays register-resident.
    RH = max(2, chunk_pixels // W)
    RH = min(RH, TH)
    assert RH % 2 == 0 and TH % RH == 0, "chunk rows must be even and divide TH"

    xb = x_nhwc.astype(jnp.bfloat16)
    xp = jnp.pad(xb, ((0, 0), (pad, pad), (pad, pad), (0, 0)))

    # Fold conv taps into the matmul contraction (lane) axis.
    #   - If the full KH*KW*Cin contraction fits in one 128-lane tile, fold
    #     everything (layer 1: K=25): single dot per chunk, no halo.
    #   - Otherwise fold only the KW taps (layers 2/3: K=160/192) and loop KH
    #     inside the kernel.
    if KH * KW * Cin <= 128:
        pieces = [xp[:, kh:kh + H, kw:kw + W, :]
                  for kh in range(KH) for kw in range(KW)]
        wf = w_hwio.reshape(KH * KW * Cin, Cout)[None]     # (1, K, Cout)
        kh_taps = 1
    else:
        pieces = [xp[:, :, kw:kw + W, :] for kw in range(KW)]
        wf = w_hwio.reshape(KH, KW * Cin, Cout)            # (KH, K, Cout)
        kh_taps = KH
    xcat = jnp.concatenate(pieces, axis=-1)                # (N, Hc, W, K) bf16

    K = xcat.shape[-1]
    kpad = -K % 8                                          # sublane-align K
    if kpad:
        xcat = jnp.pad(xcat, ((0, 0), (0, 0), (0, 0), (0, kpad)))
        wf = jnp.pad(wf, ((0, 0), (0, kpad), (0, 0)))
    Kp = K + kpad

    # Pre-tile H with a (kh_taps-1)-row halo so the kernel sees plain,
    # non-overlapping blocks (with TH = H this is a single slice per image).
    THp = TH + kh_taps - 1
    xt = jnp.stack([xcat[:, t * TH: t * TH + THp] for t in range(n_ht)], axis=1)
    wf = wf.astype(jnp.bfloat16)

    kernel = functools.partial(_conv_bn_relu_pool_kernel, KH=kh_taps, RH=RH)
    out = pl.pallas_call(
        kernel,
        out_shape=jax.ShapeDtypeStruct((N, n_ht, TH // 2, Wo, Cout),
                                       jnp.bfloat16),
        grid_spec=pltpu.PrefetchScalarGridSpec(
            num_scalar_prefetch=0,
            grid=(N, n_ht),
            in_specs=[
                pl.BlockSpec((1, 1, THp, W, Kp), lambda n, t: (n, t, 0, 0, 0)),
                pl.BlockSpec((kh_taps, Kp, Cout), lambda n, t: (0, 0, 0)),
                pl.BlockSpec((1, Cout), lambda n, t: (0, 0)),
                pl.BlockSpec((1, Cout), lambda n, t: (0, 0)),
            ],
            out_specs=pl.BlockSpec((1, 1, TH // 2, Wo, Cout),
                                   lambda n, t: (n, t, 0, 0, 0)),
        ),
        compiler_params=pltpu.CompilerParams(
            dimension_semantics=("parallel", "parallel"),
            vmem_limit_bytes=32 * 1024 * 1024,     # fits v7x's 64 MiB VMEM/TC
        ),
    )(xt, wf, scale, shift)
    return out.reshape(N, Ho, Wo, Cout)


# --------------------------------------------------------------------------
# Classifier head: Linear(32768, 512) + ReLU + Linear(512, 2), fused.
# Grid = (hidden-dim blocks, K tiles): the hidden dim is a "parallel" axis so
# the 32 MiB bf16 fc1 weight stream is sharded across both v7x TensorCores;
# K (the reduction over the 32768 flattened features) is the innermost
# "arbitrary" axis with an f32 VMEM accumulator per hidden block.  Per-block
# partial logits (nh, N, 2) are summed in the wrapper.
# --------------------------------------------------------------------------
def _mlp_head_kernel(x_ref, w1_ref, b1_ref, w2_ref, o_ref, acc_ref):
    k = pl.program_id(1)

    @pl.when(k == 0)
    def _():
        acc_ref[...] = jnp.zeros_like(acc_ref)

    acc_ref[...] += jnp.dot(x_ref[...], w1_ref[...],
                            preferred_element_type=jnp.float32)

    @pl.when(k == pl.num_programs(1) - 1)
    def _():
        h = jnp.maximum(acc_ref[...] + b1_ref[...], 0.0)      # (N, Hdb) f32
        o_ref[0] = jnp.dot(h, w2_ref[...],                    # partial logits
                           preferred_element_type=jnp.float32)


def mlp_head(x, w1, b1, w2, b2, *, tk=8192, hd_blocks=2):
    N, F = x.shape
    Hd = w1.shape[1]
    C = w2.shape[1]
    assert F % tk == 0 and Hd % hd_blocks == 0
    Hdb = Hd // hd_blocks

    partials = pl.pallas_call(
        _mlp_head_kernel,
        out_shape=jax.ShapeDtypeStruct((hd_blocks, N, C), jnp.float32),
        grid_spec=pltpu.PrefetchScalarGridSpec(
            num_scalar_prefetch=0,
            grid=(hd_blocks, F // tk),
            in_specs=[
                pl.BlockSpec((N, tk), lambda h, k: (0, k)),
                pl.BlockSpec((tk, Hdb), lambda h, k: (k, h)),
                pl.BlockSpec((1, Hdb), lambda h, k: (0, h)),
                pl.BlockSpec((Hdb, C), lambda h, k: (h, 0)),
            ],
            out_specs=pl.BlockSpec((1, N, C), lambda h, k: (h, 0, 0)),
            scratch_shapes=[pltpu.VMEM((N, Hdb), jnp.float32)],
        ),
        compiler_params=pltpu.CompilerParams(
            dimension_semantics=("parallel", "arbitrary"),
            vmem_limit_bytes=32 * 1024 * 1024,
        ),
    )(x, w1, b1, w2)
    return partials.sum(axis=0) + b2                           # (N, C) f32


# --------------------------------------------------------------------------
# Full forward pass (Pallas kernels + wrapper glue).
# --------------------------------------------------------------------------
def custom_cnn_forward(x_nchw, conv_params, w1, b1, w2, b2):
    x = jnp.transpose(x_nchw, (0, 2, 3, 1))                  # NCHW -> NHWC
    for (w, b, gamma, beta, mean, var, pad) in conv_params:
        scale = (gamma / jnp.sqrt(var + BN_EPS)).reshape(1, -1).astype(jnp.float32)
        shift = (beta + (b - mean) * scale[0]).reshape(1, -1).astype(jnp.float32)
        x = conv_bn_relu_pool(x, w, scale, shift, pad=pad)
    flat = x.reshape(x.shape[0], -1)     # NHWC flatten (bf16); w1 is permuted to match
    # fc1 weight in bf16 (pre-cast once at parameter-load time in real use);
    # fc2 stays f32 (it is tiny).
    w1b = w1 if w1.dtype == jnp.bfloat16 else w1.astype(jnp.bfloat16)
    return mlp_head(flat, w1b, b1, w2, b2)


# --------------------------------------------------------------------------
# Pure-JAX f32 reference (same eval-mode semantics) for a sanity check.
# --------------------------------------------------------------------------
def reference_forward(x_nchw, conv_params, w1, b1, w2, b2):
    x = jnp.transpose(x_nchw, (0, 2, 3, 1)).astype(jnp.float32)
    for (w, b, gamma, beta, mean, var, pad) in conv_params:
        y = lax.conv_general_dilated(
            x, w, window_strides=(1, 1), padding=[(pad, pad), (pad, pad)],
            dimension_numbers=("NHWC", "HWIO", "NHWC"))
        y = y + b
        y = (y - mean) / jnp.sqrt(var + BN_EPS) * gamma + beta
        y = jnp.maximum(y, 0.0)
        x = lax.reduce_window(y, -jnp.inf, lax.max,
                              (1, 2, 2, 1), (1, 2, 2, 1), "VALID")
    flat = x.reshape(x.shape[0], -1)
    h = jnp.maximum(flat @ w1 + b1, 0.0)
    return h @ w2 + b2


if __name__ == "__main__":
    key = jax.random.PRNGKey(0)
    ks = list(jax.random.split(key, 24))
    ki = 0

    def nrm(shape, scale):
        global ki
        v = scale * jax.random.normal(ks[ki], shape, jnp.float32)
        ki += 1
        return v

    def uni(shape, lo, hi):
        global ki
        v = jax.random.uniform(ks[ki], shape, jnp.float32, lo, hi)
        ki += 1
        return v

    # Conv stacks: (kernel, Cin, Cout, padding) — mirrors CustomCNN.features.
    conv_cfgs = [(5, 1, 32, 2), (5, 32, 64, 2), (3, 64, 128, 1)]
    conv_params = []
    for (k_sz, cin, cout, pad) in conv_cfgs:
        w = nrm((k_sz, k_sz, cin, cout), 1.0 / np.sqrt(k_sz * k_sz * cin))  # HWIO
        b = nrm((cout,), 0.1)
        gamma = uni((cout,), 0.8, 1.2)
        beta = nrm((cout,), 0.1)
        mean = nrm((cout,), 0.1)
        var = uni((cout,), 0.5, 1.5)
        conv_params.append((w, b, gamma, beta, mean, var, pad))

    # Classifier: Linear(128*16*16, 512) and Linear(512, 2).
    # Generate FC1 in PyTorch layout (out, in) with `in` indexed as c*256+h*16+w,
    # then permute so it matches the NHWC flatten used by the kernel path.
    w_fc1_torch = nrm((512, 128 * 16 * 16), 1.0 / np.sqrt(128 * 16 * 16))
    b_fc1 = nrm((512,), 0.1)
    w_fc2_torch = nrm((2, 512), 1.0 / np.sqrt(512))
    b_fc2 = nrm((2,), 0.1)

    w1 = jnp.transpose(w_fc1_torch.reshape(512, 128, 16, 16),
                       (2, 3, 1, 0)).reshape(16 * 16 * 128, 512)
    b1 = b_fc1.reshape(1, 512)
    w2 = w_fc2_torch.T                      # (512, 2)
    b2 = b_fc2.reshape(1, 2)
    w1_bf16 = w1.astype(jnp.bfloat16)       # one-time cast at param-load time

    # Input: NCHW, 1 channel, 128x128 spatial (pinned by Linear(128*16*16, .)).
    x_nchw = jax.random.normal(ks[ki], (2, 1, 128, 128), jnp.float32)

    out = jax.block_until_ready(
        custom_cnn_forward(x_nchw, conv_params, w1_bf16, b1, w2, b2))
    ref = jax.block_until_ready(
        reference_forward(x_nchw, conv_params, w1, b1, w2, b2))

    # Tolerance accounts for bf16 activations/weights (f32 accumulation).
    np.testing.assert_allclose(np.asarray(out), np.asarray(ref),
                               rtol=2e-2, atol=2e-2)
    print("KERNEL_OK")
</pallas_src>

<mosaic_0001>
module attributes {stable_mosaic.version = 11 : i64} {
  func.func @_conv_bn_relu_pool_kernel(%arg0: i32, %arg1: i32, %arg2: memref<1x1x128x128x32xbf16, #tpu.memory_space<vmem>>, %arg3: memref<1x32x32xbf16, #tpu.memory_space<vmem>>, %arg4: memref<1x32xf32, #tpu.memory_space<vmem>>, %arg5: memref<1x32xf32, #tpu.memory_space<vmem>>, %arg6: memref<1x1x64x64x32xbf16, #tpu.memory_space<vmem>>) attributes {dimension_semantics = [#tpu.dimension_semantics<parallel>, #tpu.dimension_semantics<parallel>], iteration_bounds = array<i64: 2, 1>, scalar_prefetch = 0 : i64, scratch_operands = 0 : i64, tpu.core_type = #tpu.core_type<tc>, window_params = [{transform_indices = @transform_0, window_bounds = array<i64: 1, 1, 128, 128, 32>}, {pipeline_mode = #tpu.pipeline_mode<synchronous>, transform_indices = @transform_1, window_bounds = array<i64: 1, 32, 32>}, {pipeline_mode = #tpu.pipeline_mode<synchronous>, transform_indices = @transform_2, window_bounds = array<i64: 1, 32>}, {pipeline_mode = #tpu.pipeline_mode<synchronous>, transform_indices = @transform_3, window_bounds = array<i64: 1, 32>}, {transform_indices = @transform_4, window_bounds = array<i64: 1, 1, 64, 64, 32>}]} {
    %c0 = arith.constant 0 : index
    %c0_0 = arith.constant 0 : index
    %0 = vector.load %arg4[%c0, %c0_0] : memref<1x32xf32, #tpu.memory_space<vmem>>, vector<1x32xf32>
    %c0_1 = arith.constant 0 : index
    %c0_2 = arith.constant 0 : index
    %1 = vector.load %arg5[%c0_1, %c0_2] : memref<1x32xf32, #tpu.memory_space<vmem>>, vector<1x32xf32>
    %c0_i32 = arith.constant 0 : i32
    %c64_i32 = arith.constant 64 : i32
    %2 = arith.addi %c0_i32, %c64_i32 : i32
    %c1_i32 = arith.constant 1 : i32
    scf.for %arg7 = %c0_i32 to %2 step %c1_i32  : i32 {
      %c1_i32_4 = arith.constant 1 : i32
      %3 = arith.muli %arg7, %c1_i32_4 : i32
      %c0_i32_5 = arith.constant 0 : i32
      %4 = arith.addi %c0_i32_5, %3 : i32
      %c2_i32 = arith.constant 2 : i32
      %5 = arith.muli %4, %c2_i32 : i32
      %cst = arith.constant 0.000000e+00 : f32
      %6 = vector.broadcast %cst : f32 to vector<256x32xf32>
      %c0_i32_6 = arith.constant 0 : i32
      %7 = arith.addi %5, %c0_i32_6 : i32
      %c0_7 = arith.constant 0 : index
      %c0_8 = arith.constant 0 : index
      %8 = arith.index_cast %7 : i32 to index
      %c0_9 = arith.constant 0 : index
      %c0_10 = arith.constant 0 : index
      %9 = vector.load %arg2[%c0_7, %c0_8, %8, %c0_9, %c0_10] : memref<1x1x128x128x32xbf16, #tpu.memory_space<vmem>>, vector<1x1x2x128x32xbf16>
      %10 = vector.shape_cast %9 : vector<1x1x2x128x32xbf16> to vector<2x128x32xbf16>
      %11 = vector.shape_cast %10 : vector<2x128x32xbf16> to vector<256x32xbf16>
      %c0_11 = arith.constant 0 : index
      %c0_12 = arith.constant 0 : index
      %c0_13 = arith.constant 0 : index
      %12 = vector.load %arg3[%c0_11, %c0_12, %c0_13] : memref<1x32x32xbf16, #tpu.memory_space<vmem>>, vector<1x32x32xbf16>
      %13 = vector.shape_cast %12 : vector<1x32x32xbf16> to vector<32x32xbf16>
      %cst_14 = arith.constant dense<0.000000e+00> : vector<256x32xf32>
      %14 = tpu.matmul %11, %13, %cst_14 {dimension_numbers = #tpu.dot_dimension_numbers<[1], [0], [0], [1], [0, 0, 1, 1], [], []>} : vector<256x32xbf16>, vector<32x32xbf16>, vector<256x32xf32> -> vector<256x32xf32>
      %15 = arith.addf %6, %14 : vector<256x32xf32>
      %16 = vector.broadcast %0 : vector<1x32xf32> to vector<256x32xf32>
      %17 = arith.mulf %15, %16 : vector<256x32xf32>
      %18 = vector.broadcast %1 : vector<1x32xf32> to vector<256x32xf32>
      %19 = arith.addf %17, %18 : vector<256x32xf32>
      %cst_15 = arith.constant 0.000000e+00 : f32
      %20 = vector.broadcast %cst_15 : f32 to vector<256x32xf32>
      %21 = arith.maximumf %19, %20 : vector<256x32xf32>
      %22 = vector.shape_cast %21 : vector<256x32xf32> to vector<1x2x128x32xf32>
      %23 = vector.extract_strided_slice %22 {offsets = [0, 0, 0, 0], sizes = [1, 1, 128, 32], strides = [1, 1, 1, 1]} : vector<1x2x128x32xf32> to vector<1x1x128x32xf32>
      %24 = vector.shape_cast %23 : vector<1x1x128x32xf32> to vector<1x128x32xf32>
      %25 = vector.extract_strided_slice %22 {offsets = [0, 1, 0, 0], sizes = [1, 1, 128, 32], strides = [1, 1, 1, 1]} : vector<1x2x128x32xf32> to vector<1x1x128x32xf32>
      %26 = vector.shape_cast %25 : vector<1x1x128x32xf32> to vector<1x128x32xf32>
      %27 = arith.maximumf %24, %26 : vector<1x128x32xf32>
      %28 = vector.shape_cast %27 : vector<1x128x32xf32> to vector<1x64x2x32xf32>
      %29 = vector.extract_strided_slice %28 {offsets = [0, 0, 0, 0], sizes = [1, 64, 1, 32], strides = [1, 1, 1, 1]} : vector<1x64x2x32xf32> to vector<1x64x1x32xf32>
      %30 = vector.shape_cast %29 : vector<1x64x1x32xf32> to vector<1x64x32xf32>
      %31 = vector.extract_strided_slice %28 {offsets = [0, 0, 1, 0], sizes = [1, 64, 1, 32], strides = [1, 1, 1, 1]} : vector<1x64x2x32xf32> to vector<1x64x1x32xf32>
      %32 = vector.shape_cast %31 : vector<1x64x1x32xf32> to vector<1x64x32xf32>
      %33 = arith.maximumf %30, %32 : vector<1x64x32xf32>
      %34 = arith.truncf %33 : vector<1x64x32xf32> to vector<1x64x32xbf16>
      %c1_i32_16 = arith.constant 1 : i32
      %35 = arith.muli %4, %c1_i32_16 : i32
      %c0_17 = arith.constant 0 : index
      %c0_18 = arith.constant 0 : index
      %36 = arith.index_cast %35 : i32 to index
      %c0_19 = arith.constant 0 : index
      %c0_20 = arith.constant 0 : index
      %37 = vector.load %arg6[%c0_17, %c0_18, %36, %c0_19, %c0_20] : memref<1x1x64x64x32xbf16, #tpu.memory_space<vmem>>, vector<1x1x1x64x32xbf16>
      %38 = vector.shape_cast %37 : vector<1x1x1x64x32xbf16> to vector<1x64x32xbf16>
      %39 = vector.shape_cast %34 : vector<1x64x32xbf16> to vector<1x1x1x64x32xbf16>
      tpu.vector_store %arg6[%c0_17, %c0_18, %36, %c0_19, %c0_20], %39 {strides = array<i32>} : memref<1x1x64x64x32xbf16, #tpu.memory_space<vmem>>, vector<1x1x1x64x32xbf16>,
    }
    %c64_i32_3 = arith.constant 64 : i32
    return
  }
  func.func @transform_0(%arg0: i32, %arg1: i32) -> (i32, i32, i32, i32, i32) {
    %c0_i32 = arith.constant 0 : i32
    %c0_i32_0 = arith.constant 0 : i32
    %c0_i32_1 = arith.constant 0 : i32
    %c0_i32_2 = arith.constant 0 : i32
    return %arg0, %arg1, %c0_i32, %c0_i32_0, %c0_i32_1 : i32, i32, i32, i32, i32
  }
  func.func @transform_1(%arg0: i32, %arg1: i32) -> (i32, i32, i32) {
    %c0_i32 = arith.constant 0 : i32
    %c0_i32_0 = arith.constant 0 : i32
    %c0_i32_1 = arith.constant 0 : i32
    %c0_i32_2 = arith.constant 0 : i32
    return %c0_i32, %c0_i32_0, %c0_i32_1 : i32, i32, i32
  }
  func.func @transform_2(%arg0: i32, %arg1: i32) -> (i32, i32) {
    %c0_i32 = arith.constant 0 : i32
    %c0_i32_0 = arith.constant 0 : i32
    %c0_i32_1 = arith.constant 0 : i32
    return %c0_i32, %c0_i32_0 : i32, i32
  }
  func.func @transform_3(%arg0: i32, %arg1: i32) -> (i32, i32) {
    %c0_i32 = arith.constant 0 : i32
    %c0_i32_0 = arith.constant 0 : i32
    %c0_i32_1 = arith.constant 0 : i32
    return %c0_i32, %c0_i32_0 : i32, i32
  }
  func.func @transform_4(%arg0: i32, %arg1: i32) -> (i32, i32, i32, i32, i32) {
    %c0_i32 = arith.constant 0 : i32
    %c0_i32_0 = arith.constant 0 : i32
    %c0_i32_1 = arith.constant 0 : i32
    %c0_i32_2 = arith.constant 0 : i32
    return %arg0, %arg1, %c0_i32, %c0_i32_0, %c0_i32_1 : i32, i32, i32, i32, i32
  }
}

</mosaic_0001>

<llo_original>
// kernel: tpu_custom_call.1
$region0: #{tpu_custom_call.1}
  #allocation0 [shape = 'u32[]', space=smem, size = 0x4, offset = 0x4, fixed_abs, tag = 'smem constant byte address 0x4 - core index']
  #allocation1 [shape = 'u32[144,128]{1,0:T(1,128)}', space=vmem, size = 0x12000, scoped, tag = 'internal scratch']
  %s0 = inlined_call_operand.vmem [shape: bf16[2,1,128,128,32], index: 0, kind: input, shape index: {}]
  %s1 = inlined_call_operand.vmem [shape: bf16[1,32,32], index: 1, kind: input, shape index: {}]
  %s2 = inlined_call_operand.vmem [shape: f32[1,32], index: 2, kind: input, shape index: {}]
  %s3 = inlined_call_operand.vmem [shape: f32[1,32], index: 3, kind: input, shape index: {}]
  %s4 = inlined_call_operand.vmem [shape: bf16[2,1,64,64,32], index: 4, kind: output, shape index: {}]
  %s5 = sld [smem:[#allocation0]]
  $region56: #{tpu_custom_call.1} parent=0
    _
  %s7 = ssub.s32 1, %s5
  %s8 = scalar_select 0, %s7, %s5
  loop: start=0, step=1, limit=4
  $region2: #{tpu_custom_call.1} parent=0 // loop_pre_header
    _
  $region3: #{tpu_custom_call.1} parent=0 // loop_header
    %s10 = sphi 0, %s14
    %p11 = scmp.ge.s32.totalorder %s10, 4
    %s17 = sphi 0, %s29
    %s18 = sphi 0, %s25
    %s19 = sphi 0, %s17
    %s20 = sphi 0, %s18
    %s21 = sphi 0, %s19
    %s22 = sphi 0, %s20
    %s34 = sphi 0, %s36
    %s37 = sphi 0, %s34
    %s38 = sphi 0, %s37
    %s54 = sphi 0, %s38
    %s58 = sphi 0, %s58
    %s60 = sphi 0, %s58
    %s61 = sphi 0, %s60
    %s75 = sphi 0, %s61
    %s79 = sphi 0, %s79
    %s81 = sphi 0, %s79
    %s82 = sphi 0, %s81
    %s96 = sphi 0, %s82
    %s100 = sphi 0, %s100
    %s102 = sphi 0, %s100
    %s103 = sphi 0, %s102
    %s117 = sphi 0, %s103
    %s125 = sphi 0, %s127
    %s128 = sphi 0, %s125
    %s129 = sphi 0, %s128
    %s145 = sphi 0, %s129
  $region4: #{tpu_custom_call.1} parent=0 // loop_header_branch
    %13 = sbr.rel (%p11) target = $region8
  $region5: #{tpu_custom_call.1} parent=0 // loop_body
    %s15 = ssub.s32 %s10, 1
    %s16 = ssub.s32 %s10, 2
    %s23 = sadd.s32 1, %s18
    %p24 = scmp.ge.s32.totalorder %s23, 1
    %s25 = scalar_select %p24, 0, %s23
    %s26 = sadd.s32 1, %s17
    %s27 = scalar_select %p24, %s26, %s17
    %p28 = scmp.ge.s32.totalorder %s27, 2
    %s29 = scalar_select %p28, 0, %s27
    %s30 = ssub.s32 %s17, %s29
    %s31 = ssub.s32 %s18, %s25
    %s32 = sor.u32 %s30, %s31
    %p33 = scmp.eq.s32.totalorder %s32, 0
    %s35 = sadd.s32 %s34, 1
    %s36 = scalar_select %p33, %s34, %s35
    %p39 = pneg %p33
    %p40 = scmp.eq.s32.totalorder %s10, 1
    %p41 = por %p39, %p40
    %p42 = scmp.ne.s32.totalorder %s34, %s37
    %p43 = scmp.eq.s32.totalorder %s10, 0
    %p44 = por %p42, %p43
    %p45 = scmp.ne.s32.totalorder %s34, %s37
    %p46 = scmp.eq.s32.totalorder %s15, 1
    %p47 = por %p45, %p46
    %p48 = scmp.ne.s32.totalorder %s37, %s38
    %p49 = scmp.eq.s32.totalorder %s15, 0
    %p50 = por %p48, %p49
    %p51 = scmp.ne.s32.totalorder %s37, %s38
    %p52 = scmp.eq.s32.totalorder %s16, 1
    %p53 = por %p51, %p52
    %p55 = scmp.ne.s32.totalorder %s38, %s54
    %p56 = scmp.eq.s32.totalorder %s16, 0
    %p57 = por %p55, %p56
    %s59 = sadd.s32 %s58, 1
    %p62 = scmp.eq.s32.totalorder %s10, 1
    %p63 = scmp.ne.s32.totalorder %s58, %s60
    %p64 = scmp.eq.s32.totalorder %s10, 0
    %p65 = por %p63, %p64
    %p66 = scmp.ne.s32.totalorder %s58, %s60
    %p67 = scmp.eq.s32.totalorder %s15, 1
    %p68 = por %p66, %p67
    %p69 = scmp.ne.s32.totalorder %s60, %s61
    %p70 = scmp.eq.s32.totalorder %s15, 0
    %p71 = por %p69, %p70
    %p72 = scmp.ne.s32.totalorder %s60, %s61
    %p73 = scmp.eq.s32.totalorder %s16, 1
    %p74 = por %p72, %p73
    %p76 = scmp.ne.s32.totalorder %s61, %s75
    %p77 = scmp.eq.s32.totalorder %s16, 0
    %p78 = por %p76, %p77
    %s80 = sadd.s32 %s79, 1
    %p83 = scmp.eq.s32.totalorder %s10, 1
    %p84 = scmp.ne.s32.totalorder %s79, %s81
    %p85 = scmp.eq.s32.totalorder %s10, 0
    %p86 = por %p84, %p85
    %p87 = scmp.ne.s32.totalorder %s79, %s81
    %p88 = scmp.eq.s32.totalorder %s15, 1
    %p89 = por %p87, %p88
    %p90 = scmp.ne.s32.totalorder %s81, %s82
    %p91 = scmp.eq.s32.totalorder %s15, 0
    %p92 = por %p90, %p91
    %p93 = scmp.ne.s32.totalorder %s81, %s82
    %p94 = scmp.eq.s32.totalorder %s16, 1
    %p95 = por %p93, %p94
    %p97 = scmp.ne.s32.totalorder %s82, %s96
    %p98 = scmp.eq.s32.totalorder %s16, 0
    %p99 = por %p97, %p98
    %s101 = sadd.s32 %s100, 1
    %p104 = scmp.eq.s32.totalorder %s10, 1
    %p105 = scmp.ne.s32.totalorder %s100, %s102
    %p106 = scmp.eq.s32.totalorder %s10, 0
    %p107 = por %p105, %p106
    %p108 = scmp.ne.s32.totalorder %s100, %s102
    %p109 = scmp.eq.s32.totalorder %s15, 1
    %p110 = por %p108, %p109
    %p111 = scmp.ne.s32.totalorder %s102, %s103
    %p112 = scmp.eq.s32.totalorder %s15, 0
    %p113 = por %p111, %p112
    %p114 = scmp.ne.s32.totalorder %s102, %s103
    %p115 = scmp.eq.s32.totalorder %s16, 1
    %p116 = por %p114, %p115
    %p118 = scmp.ne.s32.totalorder %s103, %s117
    %p119 = scmp.eq.s32.totalorder %s16, 0
    %p120 = por %p118, %p119
    %s121 = ssub.s32 %s17, %s29
    %s122 = ssub.s32 %s18, %s25
    %s123 = sor.u32 %s121, %s122
    %p124 = scmp.eq.s32.totalorder %s123, 0
    %s126 = sadd.s32 %s125, 1
    %s127 = scalar_select %p124, %s125, %s126
    %p130 = pneg %p124
    %p131 = scmp.eq.s32.totalorder %s10, 1
    %p132 = por %p130, %p131
    %p133 = scmp.ne.s32.totalorder %s125, %s128
    %p134 = scmp.eq.s32.totalorder %s10, 0
    %p135 = por %p133, %p134
    %p136 = scmp.ne.s32.totalorder %s125, %s128
    %p137 = scmp.eq.s32.totalorder %s15, 1
    %p138 = por %p136, %p137
    %p139 = scmp.ne.s32.totalorder %s128, %s129
    %p140 = scmp.eq.s32.totalorder %s15, 0
    %p141 = por %p139, %p140
    %p142 = scmp.ne.s32.totalorder %s128, %s129
    %p143 = scmp.eq.s32.totalorder %s16, 1
    %p144 = por %p142, %p143
    %p146 = scmp.ne.s32.totalorder %s129, %s145
    %p147 = scmp.eq.s32.totalorder %s16, 0
    %p148 = por %p146, %p147
    %p149 = scmp.le.s32.totalorder 1, %s10
    %p150 = scmp.lt.s32.totalorder %s10, 3
    %p151 = pnand %p149, %p150
    %p152 = pneg %p151
    // Predicated region
    $region9: #{tpu_custom_call.1} parent=5 // pred_check
      _
    $region10: #{tpu_custom_call.1} parent=5 // pred_check_branch
      %154 = sbr.rel (%p151) target = $region12
    $region11: #{tpu_custom_call.1} parent=5 // pred_region
      %s155 = ssub.s32 %s10, 1
      // Predicated region
      $region13: #{tpu_custom_call.1} parent=11 // pred_check
        %p156 = pneg %p71
      $region14: #{tpu_custom_call.1} parent=11 // pred_check_branch
        %158 = sbr.rel (%p156) target = $region16
      $region15: #{tpu_custom_call.1} parent=11 // pred_region
        _
      $region16: #{tpu_custom_call.1} parent=11 // pred_fallthru
        _
      // Predicated region
      $region17: #{tpu_custom_call.1} parent=11 // pred_check
        %p159 = pneg %p92
      $region18: #{tpu_custom_call.1} parent=11 // pred_check_branch
        %161 = sbr.rel (%p159) target = $region20
      $region19: #{tpu_custom_call.1} parent=11 // pred_region
        _
      $region20: #{tpu_custom_call.1} parent=11 // pred_fallthru
        _
      // Predicated region
      $region21: #{tpu_custom_call.1} parent=11 // pred_check
        %p162 = pneg %p113
      $region22: #{tpu_custom_call.1} parent=11 // pred_check_branch
        %164 = sbr.rel (%p162) target = $region24
      $region23: #{tpu_custom_call.1} parent=11 // pred_region
        _
      $region24: #{tpu_custom_call.1} parent=11 // pred_fallthru
        _
    $region12: #{tpu_custom_call.1} parent=5 // pred_fallthru
      _
    %p165 = scmp.lt.s32.totalorder %s10, 2
    // Predicated region
    $region25: #{tpu_custom_call.1} parent=5 // pred_check
      %p166 = pneg %p165
    $region26: #{tpu_custom_call.1} parent=5 // pred_check_branch
      %168 = sbr.rel (%p166) target = $region28
    $region27: #{tpu_custom_call.1} parent=5 // pred_region
      // Predicated region
      $region29: #{tpu_custom_call.1} parent=27 // pred_check
        %p169 = pneg %p44
      $region30: #{tpu_custom_call.1} parent=27 // pred_check_branch
        %171 = sbr.rel (%p169) target = $region32
      $region31: #{tpu_custom_call.1} parent=27 // pred_region
        %p172 = scmp.lt.s32.totalorder %s17, 1
        %s173 = scalar_select %p172, %s17, 1
        %p174 = scmp.lt.s32.totalorder %s18, 0
        %s175 = scalar_select %p174, %s18, 0
        %s176 = smul.addr %s175, 2048
        %s177 = smul.addr %s173, 2048
        %s178 = sadd.s32 %s176, %s177
        %s179 = smul.addr %s178, 4
        %s180 = scalar_lea.vmem %s0, %s179
      $region32: #{tpu_custom_call.1} parent=27 // pred_fallthru
        _
    $region28: #{tpu_custom_call.1} parent=5 // pred_fallthru
      _
    %p181 = scmp.le.s32.totalorder 1, %s10
    %p182 = scmp.lt.s32.totalorder %s10, 3
    %p183 = pnand %p181, %p182
    %p184 = pneg %p183
    // Predicated region
    $region33: #{tpu_custom_call.1} parent=5 // pred_check
      _
    $region34: #{tpu_custom_call.1} parent=5 // pred_check_branch
      %186 = sbr.rel (%p183) target = $region36
    $region35: #{tpu_custom_call.1} parent=5 // pred_region
      %s187 = ssub.s32 %s10, 1
      %p188 = scmp.lt.s32.totalorder %s19, 1
      %s189 = scalar_select %p188, %s19, 1
      %p190 = scmp.lt.s32.totalorder %s20, 0
      %s191 = scalar_select %p190, %s20, 0
      %s192 = smul.addr %s191, 2048
      %s193 = smul.addr %s189, 2048
      %s194 = sadd.s32 %s192, %s193
      %s195 = smul.addr %s194, 4
      %s196 = scalar_lea.vmem %s0, %s195
      %p197 = pneg %p50
      %p198 = pneg %p47
      %p199 = pneg %p71
      %p200 = pneg %p68
      %p201 = pneg %p92
      %p202 = pneg %p89
      %p203 = pneg %p113
      %p204 = pneg %p110
      %p205 = pneg %p141
      %p206 = pneg %p138
      %p207 = scmp.lt.s32.totalorder %s19, 1
      %s208 = scalar_select %p207, %s19, 1
      %p209 = scmp.lt.s32.totalorder %s20, 0
      %s210 = scalar_select %p209, %s20, 0
      %s211 = smul.addr %s210, 512
      %s212 = smul.addr %s208, 512
      %s213 = sadd.s32 %s211, %s212
      %s214 = smul.addr %s213, 4
      %s215 = scalar_lea.vmem %s4, %s214
      %p216 = scmp.lt.s32.totalorder %s19, 1
      %s217 = scalar_select %p216, %s19, 1
      %p218 = scmp.lt.s32.totalorder %s20, 0
      %s219 = scalar_select %p218, %s20, 0
      %s220 = smul.addr %s219, 2048
      %s221 = smul.addr %s217, 2048
      %s222 = sadd.s32 %s220, %s221
      %s223 = smul.addr %s222, 4
      %s224 = scalar_lea.vmem %s0, %s223
      %p225 = scmp.lt.s32.totalorder %s19, 1
      %s226 = scalar_select %p225, %s19, 1
      %p227 = scmp.lt.s32.totalorder %s20, 0
      %s228 = scalar_select %p227, %s20, 0
      %s229 = smul.addr %s228, 512
      %s230 = smul.addr %s226, 512
      %s231 = sadd.s32 %s229, %s230
      %s232 = smul.addr %s231, 4
      %s233 = scalar_lea.vmem %s4, %s232
      %v235 = vld [vmem:[%s2] sm:$0x1]
      %v236 = vld [vmem:[%s3] sm:$0x1]
      loop: start=0, step=1, limit=64
      $region37: #{tpu_custom_call.1} parent=35 // loop_pre_header
        _
      $region38: #{tpu_custom_call.1} parent=35 // loop_header
        %s238 = sphi 0, %s242
        %p239 = scmp.ge.s32.totalorder %s238, 64
      $region39: #{tpu_custom_call.1} parent=35 // loop_header_branch
        %241 = sbr.rel (%p239) target = $region43
      $region40: #{tpu_custom_call.1} parent=35 // loop_body
        %s243 = smul.u32 %s238, 2
        %s244 = smul.u32 %s243, 16
        %s245 = smul.addr %s244, 4
        %s246 = scalar_lea.vmem %s224, %s245
        %v247 = vld [vmem:[%s246] sm:$0xf]
        %v248 = vld [vmem:[%s246 + $0x4] sm:$0xf]
        %v249 = vld [vmem:[%s246 + $0x8] sm:$0xf]
        %v250 = vld [vmem:[%s246 + $0xc] sm:$0xf]
        %v251 = vld [vmem:[%s246 + $0x10] sm:$0xf]
        %v252 = vld [vmem:[%s246 + $0x14] sm:$0xf]
        %v253 = vld [vmem:[%s246 + $0x18] sm:$0xf]
        %v254 = vld [vmem:[%s246 + $0x1c] sm:$0xf]
        %v255 = vld [vmem:[%s246 + $0x20] sm:$0xf]
        %v256 = vld [vmem:[%s246 + $0x24] sm:$0xf]
        %v257 = vld [vmem:[%s246 + $0x28] sm:$0xf]
        %v258 = vld [vmem:[%s246 + $0x2c] sm:$0xf]
        %v259 = vld [vmem:[%s246 + $0x30] sm:$0xf]
        %v260 = vld [vmem:[%s246 + $0x34] sm:$0xf]
        %v261 = vld [vmem:[%s246 + $0x38] sm:$0xf]
        %v262 = vld [vmem:[%s246 + $0x3c] sm:$0xf]
        %v263 = vld [vmem:[%s246 + $0x40] sm:$0xf]
        %v264 = vld [vmem:[%s246 + $0x44] sm:$0xf]
        %v265 = vld [vmem:[%s246 + $0x48] sm:$0xf]
        %v266 = vld [vmem:[%s246 + $0x4c] sm:$0xf]
        %v267 = vld [vmem:[%s246 + $0x50] sm:$0xf]
        %v268 = vld [vmem:[%s246 + $0x54] sm:$0xf]
        %v269 = vld [vmem:[%s246 + $0x58] sm:$0xf]
        %v270 = vld [vmem:[%s246 + $0x5c] sm:$0xf]
        %v271 = vld [vmem:[%s246 + $0x60] sm:$0xf]
        %v272 = vld [vmem:[%s246 + $0x64] sm:$0xf]
        %v273 = vld [vmem:[%s246 + $0x68] sm:$0xf]
        %v274 = vld [vmem:[%s246 + $0x6c] sm:$0xf]
        %v275 = vld [vmem:[%s246 + $0x70] sm:$0xf]
        %v276 = vld [vmem:[%s246 + $0x74] sm:$0xf]
        %v277 = vld [vmem:[%s246 + $0x78] sm:$0xf]
        %v278 = vld [vmem:[%s246 + $0x7c] sm:$0xf]
        %v279 = vld [vmem:[%s1] sm:$0xf]
        %v280 = vld [vmem:[%s1 + $0x4] sm:$0xf]
        %v281 = vld [vmem:[%s1 + $0x8] sm:$0xf]
        %v282 = vld [vmem:[%s1 + $0xc] sm:$0xf]
        %v315 = vunpack.c.l.b16 %v247
        %v316 = vunpack.c.l.b16 %v248
        %v317 = vunpack.c.l.b16 %v249
        %v318 = vunpack.c.l.b16 %v250
        %v319 = vunpack.c.l.b16 %v251
        %v320 = vunpack.c.l.b16 %v252
        %v321 = vunpack.c.l.b16 %v253
        %v322 = vunpack.c.l.b16 %v254
        %v323 = vunpack.c.l.b16 %v255
        %v324 = vunpack.c.l.b16 %v256
        %v325 = vunpack.c.l.b16 %v257
        %v326 = vunpack.c.l.b16 %v258
        %v327 = vunpack.c.l.b16 %v259
        %v328 = vunpack.c.l.b16 %v260
        %v329 = vunpack.c.l.b16 %v261
        %v330 = vunpack.c.l.b16 %v262
        %v331 = vunpack.c.l.b16 %v263
        %v332 = vunpack.c.l.b16 %v264
        %v333 = vunpack.c.l.b16 %v265
        %v334 = vunpack.c.l.b16 %v266
        %v335 = vunpack.c.l.b16 %v267
        %v336 = vunpack.c.l.b16 %v268
        %v337 = vunpack.c.l.b16 %v269
        %v338 = vunpack.c.l.b16 %v270
        %v339 = vunpack.c.l.b16 %v271
        %v340 = vunpack.c.l.b16 %v272
        %v341 = vunpack.c.l.b16 %v273
        %v342 = vunpack.c.l.b16 %v274
        %v343 = vunpack.c.l.b16 %v275
        %v344 = vunpack.c.l.b16 %v276
        %v345 = vunpack.c.l.b16 %v277
        %v346 = vunpack.c.l.b16 %v278
        %v347 = vpack.c.b16 %v316, %v315
        %v348 = vpack.c.b16 %v318, %v317
        %v349 = vpack.c.b16 %v320, %v319
        %v350 = vpack.c.b16 %v322, %v321
        %v351 = vpack.c.b16 %v324, %v323
        %v352 = vpack.c.b16 %v326, %v325
        %v353 = vpack.c.b16 %v328, %v327
        %v354 = vpack.c.b16 %v330, %v329
        %v355 = vpack.c.b16 %v332, %v331
        %v356 = vpack.c.b16 %v334, %v333
        %v357 = vpack.c.b16 %v336, %v335
        %v358 = vpack.c.b16 %v338, %v337
        %v359 = vpack.c.b16 %v340, %v339
        %v360 = vpack.c.b16 %v342, %v341
        %v361 = vpack.c.b16 %v344, %v343
        %v362 = vpack.c.b16 %v346, %v345
        %v367 = vunpack.c.l.b16 %v279
        %v368 = vunpack.c.l.b16 %v280
        %v369 = vunpack.c.l.b16 %v281
        %v370 = vunpack.c.l.b16 %v282
        %v371 = vpack.c.b16 %v368, %v367
        %v372 = vpack.c.b16 %v370, %v369
        %vm375 = vcmask 261120
        %v377 = vsel %vm375, %v347, 0
        %v380 = vsel %vm375, %v348, 0
        %v383 = vsel %vm375, %v349, 0
        %v386 = vsel %vm375, %v350, 0
        %v389 = vsel %vm375, %v351, 0
        %v392 = vsel %vm375, %v352, 0
        %v395 = vsel %vm375, %v353, 0
        %v398 = vsel %vm375, %v354, 0
        %v401 = vsel %vm375, %v355, 0
        %v404 = vsel %vm375, %v356, 0
        %v407 = vsel %vm375, %v357, 0
        %v410 = vsel %vm375, %v358, 0
        %v413 = vsel %vm375, %v359, 0
        %v416 = vsel %vm375, %v360, 0
        %v419 = vsel %vm375, %v361, 0
        %v422 = vsel %vm375, %v362, 0
        %424 = vmatprep.subr.bf16.mxu0 0
        %425 = vmatpush1.bf16.msra.mxu0 %v371
        %426 = vmatprep.subr.bf16.mxu0 0
        %427 = vmatpush1.bf16.msra.mxu0 %v372
        %428 = vmatprep.subr.bf16.mxu0 0
        %429 = vmatpush1.bf16.msra.mxu0 0
        %430 = vmatprep.subr.bf16.mxu0 0
        %431 = vmatpush1.bf16.msra.mxu0 0
        %432 = vmatprep.subr.bf16.mxu0 0
        %433 = vmatpush1.bf16.msra.mxu0 0
        %434 = vmatprep.subr.bf16.mxu0 0
        %435 = vmatpush1.bf16.msra.mxu0 0
        %436 = vmatprep.subr.bf16.mxu0 0
        %437 = vmatpush1.bf16.msra.mxu0 0
        %438 = vmatprep.subr.bf16.mxu0 0
        %439 = vmatpush1.bf16.msra.mxu0 0
        %440 = vmatprep.subr.bf16.mxu0 0
        %441 = vmatpush1.bf16.msra.mxu0 0
        %442 = vmatprep.subr.bf16.mxu0 0
        %443 = vmatpush1.bf16.msra.mxu0 0
        %444 = vmatprep.subr.bf16.mxu0 0
        %445 = vmatpush1.bf16.msra.mxu0 0
        %446 = vmatprep.subr.bf16.mxu0 0
        %447 = vmatpush1.bf16.msra.mxu0 0
        %448 = vmatprep.subr.bf16.mxu0 0
        %449 = vmatpush1.bf16.msra.mxu0 0
        %450 = vmatprep.subr.bf16.mxu0 0
        %451 = vmatpush1.bf16.msra.mxu0 0
        %452 = vmatprep.subr.bf16.mxu0 0
        %453 = vmatpush1.bf16.msra.mxu0 0
        %454 = vmatprep.subr.bf16.mxu0 0
        %455 = vmatpush1.bf16.msra.mxu0 0
        %456 = vmatprep.mubr.bf16.mxu0 0
        %457 = vmatmul.mubr.bf16.gmra.mrb[0].mxu0 %v377
        %v458 = vpop.f32.mrb[0].mxu0
        %v459 = vadd.f32 0.0, %v458
        %v460 = vpop.f32.mrb[0].mxu0
        %v461 = vpop.f32.mrb[0].mxu0
        %v462 = vadd.f32 0.0, %v461
        %v463 = vpop.f32.mrb[0].mxu0
        %464 = vmatprep.mubr.bf16.mxu0 0
        %465 = vmatmul.mubr.bf16.gmra.mrb[0].mxu0 %v380
        %v466 = vpop.f32.mrb[0].mxu0
        %v467 = vadd.f32 0.0, %v466
        %v468 = vpop.f32.mrb[0].mxu0
        %v469 = vpop.f32.mrb[0].mxu0
        %v470 = vadd.f32 0.0, %v469
        %v471 = vpop.f32.mrb[0].mxu0
        %472 = vmatprep.mubr.bf16.mxu0 0
        %473 = vmatmul.mubr.bf16.gmra.mrb[0].mxu0 %v383
        %v474 = vpop.f32.mrb[0].mxu0
        %v475 = vadd.f32 0.0, %v474
        %v476 = vpop.f32.mrb[0].mxu0
        %v477 = vpop.f32.mrb[0].mxu0
        %v478 = vadd.f32 0.0, %v477
        %v479 = vpop.f32.mrb[0].mxu0
        %480 = vmatprep.mubr.bf16.mxu0 0
        %481 = vmatmul.mubr.bf16.gmra.mrb[0].mxu0 %v386
        %v482 = vpop.f32.mrb[0].mxu0
        %v483 = vadd.f32 0.0, %v482
        %v484 = vpop.f32.mrb[0].mxu0
        %v485 = vpop.f32.mrb[0].mxu0
        %v486 = vadd.f32 0.0, %v485
        %v487 = vpop.f32.mrb[0].mxu0
        %488 = vmatprep.mubr.bf16.mxu0 0
        %489 = vmatmul.mubr.bf16.gmra.mrb[0].mxu0 %v389
        %v490 = vpop.f32.mrb[0].mxu0
        %v491 = vadd.f32 0.0, %v490
        %v492 = vpop.f32.mrb[0].mxu0
        %v493 = vpop.f32.mrb[0].mxu0
        %v494 = vadd.f32 0.0, %v493
        %v495 = vpop.f32.mrb[0].mxu0
        %496 = vmatprep.mubr.bf16.mxu0 0
        %497 = vmatmul.mubr.bf16.gmra.mrb[0].mxu0 %v392
        %v498 = vpop.f32.mrb[0].mxu0
        %v499 = vadd.f32 0.0, %v498
        %v500 = vpop.f32.mrb[0].mxu0
        %v501 = vpop.f32.mrb[0].mxu0
        %v502 = vadd.f32 0.0, %v501
        %v503 = vpop.f32.mrb[0].mxu0
        %504 = vmatprep.mubr.bf16.mxu0 0
        %505 = vmatmul.mubr.bf16.gmra.mrb[0].mxu0 %v395
        %v506 = vpop.f32.mrb[0].mxu0
        %v507 = vadd.f32 0.0, %v506
        %v508 = vpop.f32.mrb[0].mxu0
        %v509 = vpop.f32.mrb[0].mxu0
        %v510 = vadd.f32 0.0, %v509
        %v511 = vpop.f32.mrb[0].mxu0
        %512 = vmatprep.mubr.bf16.mxu0 0
        %513 = vmatmul.mubr.bf16.gmra.mrb[0].mxu0 %v398
        %v514 = vpop.f32.mrb[0].mxu0
        %v515 = vadd.f32 0.0, %v514
        %v516 = vpop.f32.mrb[0].mxu0
        %v517 = vpop.f32.mrb[0].mxu0
        %v518 = vadd.f32 0.0, %v517
        %v519 = vpop.f32.mrb[0].mxu0
        %520 = vmatprep.mubr.bf16.mxu0 0
        %521 = vmatmul.mubr.bf16.gmra.mrb[0].mxu0 %v401
        %v522 = vpop.f32.mrb[0].mxu0
        %v523 = vadd.f32 0.0, %v522
        %v524 = vpop.f32.mrb[0].mxu0
        %v525 = vpop.f32.mrb[0].mxu0
        %v526 = vadd.f32 0.0, %v525
        %v527 = vpop.f32.mrb[0].mxu0
        %528 = vmatprep.mubr.bf16.mxu0 0
        %529 = vmatmul.mubr.bf16.gmra.mrb[0].mxu0 %v404
        %v530 = vpop.f32.mrb[0].mxu0
        %v531 = vadd.f32 0.0, %v530
        %v532 = vpop.f32.mrb[0].mxu0
        %v533 = vpop.f32.mrb[0].mxu0
        %v534 = vadd.f32 0.0, %v533
        %v535 = vpop.f32.mrb[0].mxu0
        %536 = vmatprep.mubr.bf16.mxu0 0
        %537 = vmatmul.mubr.bf16.gmra.mrb[0].mxu0 %v407
        %v538 = vpop.f32.mrb[0].mxu0
        %v539 = vadd.f32 0.0, %v538
        %v540 = vpop.f32.mrb[0].mxu0
        %v541 = vpop.f32.mrb[0].mxu0
        %v542 = vadd.f32 0.0, %v541
        %v543 = vpop.f32.mrb[0].mxu0
        %544 = vmatprep.mubr.bf16.mxu0 0
        %545 = vmatmul.mubr.bf16.gmra.mrb[0].mxu0 %v410
        %v546 = vpop.f32.mrb[0].mxu0
        %v547 = vadd.f32 0.0, %v546
        %v548 = vpop.f32.mrb[0].mxu0
        %v549 = vpop.f32.mrb[0].mxu0
        %v550 = vadd.f32 0.0, %v549
        %v551 = vpop.f32.mrb[0].mxu0
        %552 = vmatprep.mubr.bf16.mxu0 0
        %553 = vmatmul.mubr.bf16.gmra.mrb[0].mxu0 %v413
        %v554 = vpop.f32.mrb[0].mxu0
        %v555 = vadd.f32 0.0, %v554
        %v556 = vpop.f32.mrb[0].mxu0
        %v557 = vpop.f32.mrb[0].mxu0
        %v558 = vadd.f32 0.0, %v557
        %v559 = vpop.f32.mrb[0].mxu0
        %560 = vmatprep.mubr.bf16.mxu0 0
        %561 = vmatmul.mubr.bf16.gmra.mrb[0].mxu0 %v416
        %v562 = vpop.f32.mrb[0].mxu0
        %v563 = vadd.f32 0.0, %v562
        %v564 = vpop.f32.mrb[0].mxu0
        %v565 = vpop.f32.mrb[0].mxu0
        %v566 = vadd.f32 0.0, %v565
        %v567 = vpop.f32.mrb[0].mxu0
        %568 = vmatprep.mubr.bf16.mxu0 0
        %569 = vmatmul.mubr.bf16.gmra.mrb[0].mxu0 %v419
        %v570 = vpop.f32.mrb[0].mxu0
        %v571 = vadd.f32 0.0, %v570
        %v572 = vpop.f32.mrb[0].mxu0
        %v573 = vpop.f32.mrb[0].mxu0
        %v574 = vadd.f32 0.0, %v573
        %v575 = vpop.f32.mrb[0].mxu0
        %576 = vmatprep.mubr.bf16.mxu0 0
        %577 = vmatmul.mubr.bf16.gmra.mrb[0].mxu0 %v422
        %v578 = vpop.f32.mrb[0].mxu0
        %v579 = vadd.f32 0.0, %v578
        %v580 = vpop.f32.mrb[0].mxu0
        %v581 = vpop.f32.mrb[0].mxu0
        %v582 = vadd.f32 0.0, %v581
        %v583 = vpop.f32.mrb[0].mxu0
        %584 = vdwg.mxu0
        %v586 = vlaneseq
        %v587 = vshrl.u32 %v586, 7
        %v588 = vsub.s32 0, %v587
        %v589 = vrot.slane %v235, %v588
        %v591 = vmul.f32 %v459, %v589
        %v592 = vmul.f32 %v462, %v589
        %v593 = vmul.f32 %v467, %v589
        %v594 = vmul.f32 %v470, %v589
        %v595 = vmul.f32 %v475, %v589
        %v596 = vmul.f32 %v478, %v589
        %v597 = vmul.f32 %v483, %v589
        %v598 = vmul.f32 %v486, %v589
        %v599 = vmul.f32 %v491, %v589
        %v600 = vmul.f32 %v494, %v589
        %v601 = vmul.f32 %v499, %v589
        %v602 = vmul.f32 %v502, %v589
        %v603 = vmul.f32 %v507, %v589
        %v604 = vmul.f32 %v510, %v589
        %v605 = vmul.f32 %v515, %v589
        %v606 = vmul.f32 %v518, %v589
        %v607 = vmul.f32 %v523, %v589
        %v608 = vmul.f32 %v526, %v589
        %v609 = vmul.f32 %v531, %v589
        %v610 = vmul.f32 %v534, %v589
        %v611 = vmul.f32 %v539, %v589
        %v612 = vmul.f32 %v542, %v589
        %v613 = vmul.f32 %v547, %v589
        %v614 = vmul.f32 %v550, %v589
        %v615 = vmul.f32 %v555, %v589
        %v616 = vmul.f32 %v558, %v589
        %v617 = vmul.f32 %v563, %v589
        %v618 = vmul.f32 %v566, %v589
        %v619 = vmul.f32 %v571, %v589
        %v620 = vmul.f32 %v574, %v589
        %v621 = vmul.f32 %v579, %v589
        %v622 = vmul.f32 %v582, %v589
        %v624 = vlaneseq
        %v625 = vshrl.u32 %v624, 7
        %v626 = vsub.s32 0, %v625
        %v627 = vrot.slane %v236, %v626
        %v629 = vadd.f32 %v591, %v627
        %v630 = vadd.f32 %v592, %v627
        %v631 = vadd.f32 %v593, %v627
        %v632 = vadd.f32 %v594, %v627
        %v633 = vadd.f32 %v595, %v627
        %v634 = vadd.f32 %v596, %v627
        %v635 = vadd.f32 %v597, %v627
        %v636 = vadd.f32 %v598, %v627
        %v637 = vadd.f32 %v599, %v627
        %v638 = vadd.f32 %v600, %v627
        %v639 = vadd.f32 %v601, %v627
        %v640 = vadd.f32 %v602, %v627
        %v641 = vadd.f32 %v603, %v627
        %v642 = vadd.f32 %v604, %v627
        %v643 = vadd.f32 %v605, %v627
        %v644 = vadd.f32 %v606, %v627
        %v645 = vadd.f32 %v607, %v627
        %v646 = vadd.f32 %v608, %v627
        %v647 = vadd.f32 %v609, %v627
        %v648 = vadd.f32 %v610, %v627
        %v649 = vadd.f32 %v611, %v627
        %v650 = vadd.f32 %v612, %v627
        %v651 = vadd.f32 %v613, %v627
        %v652 = vadd.f32 %v614, %v627
        %v653 = vadd.f32 %v615, %v627
        %v654 = vadd.f32 %v616, %v627
        %v655 = vadd.f32 %v617, %v627
        %v656 = vadd.f32 %v618, %v627
        %v657 = vadd.f32 %v619, %v627
        %v658 = vadd.f32 %v620, %v627
        %v659 = vadd.f32 %v621, %v627
        %v660 = vadd.f32 %v622, %v627
        %v661 = vmax.f32 %v629, 0.0
        %v662 = vmax.f32 %v630, 0.0
        %v663 = vmax.f32 %v631, 0.0
        %v664 = vmax.f32 %v632, 0.0
        %v665 = vmax.f32 %v633, 0.0
        %v666 = vmax.f32 %v634, 0.0
        %v667 = vmax.f32 %v635, 0.0
        %v668 = vmax.f32 %v636, 0.0
        %v669 = vmax.f32 %v637, 0.0
        %v670 = vmax.f32 %v638, 0.0
        %v671 = vmax.f32 %v639, 0.0
        %v672 = vmax.f32 %v640, 0.0
        %v673 = vmax.f32 %v641, 0.0
        %v674 = vmax.f32 %v642, 0.0
        %v675 = vmax.f32 %v643, 0.0
        %v676 = vmax.f32 %v644, 0.0
        %v677 = vmax.f32 %v645, 0.0
        %v678 = vmax.f32 %v646, 0.0
        %v679 = vmax.f32 %v647, 0.0
        %v680 = vmax.f32 %v648, 0.0
        %v681 = vmax.f32 %v649, 0.0
        %v682 = vmax.f32 %v650, 0.0
        %v683 = vmax.f32 %v651, 0.0
        %v684 = vmax.f32 %v652, 0.0
        %v685 = vmax.f32 %v653, 0.0
        %v686 = vmax.f32 %v654, 0.0
        %v687 = vmax.f32 %v655, 0.0
        %v688 = vmax.f32 %v656, 0.0
        %v689 = vmax.f32 %v657, 0.0
        %v690 = vmax.f32 %v658, 0.0
        %v691 = vmax.f32 %v659, 0.0
        %v692 = vmax.f32 %v660, 0.0
        %v693 = vmax.f32 %v661, %v677
        %v694 = vmax.f32 %v662, %v678
        %v695 = vmax.f32 %v663, %v679
        %v696 = vmax.f32 %v664, %v680
        %v697 = vmax.f32 %v665, %v681
        %v698 = vmax.f32 %v666, %v682
        %v699 = vmax.f32 %v667, %v683
        %v700 = vmax.f32 %v668, %v684
        %v701 = vmax.f32 %v669, %v685
        %v702 = vmax.f32 %v670, %v686
        %v703 = vmax.f32 %v671, %v687
        %v704 = vmax.f32 %v672, %v688
        %v705 = vmax.f32 %v673, %v689
        %v706 = vmax.f32 %v674, %v690
        %v707 = vmax.f32 %v675, %v691
        %v708 = vmax.f32 %v676, %v692
        %v725 = vcombine.high %v693, %v693
        %v727 = vunpack.c.l.s4 1983009808
        %v728 = vunpack.c.0.s8 %v727
        %v729 = vlaneseq
        %v730 = vshrl.u32 %v729, 7
        %v731 = vsub.s32 %v728, %v730
        %v732 = vrot.slane %v693, %v731
        %v734 = vunpack.c.l.s4 1983009808
        %v735 = vunpack.c.0.s8 %v734
        %v736 = vlaneseq
        %v737 = vshrl.u32 %v736, 7
        %v738 = vsub.s32 %v735, %v737
        %v739 = vrot.slane %v725, %v738
        %v740 = vcombine.high %v732, %v732
        %v741 = vcombine.high %v739, %v739
        %v742 = vcombine.high %v694, %v694
        %v744 = vunpack.c.l.s4 1983009808
        %v745 = vunpack.c.0.s8 %v744
        %v746 = vlaneseq
        %v747 = vshrl.u32 %v746, 7
        %v748 = vsub.s32 %v745, %v747
        %v749 = vrot.slane %v694, %v748
        %v751 = vunpack.c.l.s4 1983009808
        %v752 = vunpack.c.0.s8 %v751
        %v753 = vlaneseq
        %v754 = vshrl.u32 %v753, 7
        %v755 = vsub.s32 %v752, %v754
        %v756 = vrot.slane %v742, %v755
        %v757 = vcombine.high %v749, %v749
        %v758 = vcombine.high %v756, %v756
        %v759 = vcombine.high %v695, %v695
        %v761 = vunpack.c.l.s4 1983009808
        %v762 = vunpack.c.0.s8 %v761
        %v763 = vlaneseq
        %v764 = vshrl.u32 %v763, 7
        %v765 = vsub.s32 %v762, %v764
        %v766 = vrot.slane %v695, %v765
        %v768 = vunpack.c.l.s4 1983009808
        %v769 = vunpack.c.0.s8 %v768
        %v770 = vlaneseq
        %v771 = vshrl.u32 %v770, 7
        %v772 = vsub.s32 %v769, %v771
        %v773 = vrot.slane %v759, %v772
        %v774 = vcombine.high %v766, %v766
        %v775 = vcombine.high %v773, %v773
        %v776 = vcombine.high %v696, %v696
        %v778 = vunpack.c.l.s4 1983009808
        %v779 = vunpack.c.0.s8 %v778
        %v780 = vlaneseq
        %v781 = vshrl.u32 %v780, 7
        %v782 = vsub.s32 %v779, %v781
        %v783 = vrot.slane %v696, %v782
        %v785 = vunpack.c.l.s4 1983009808
        %v786 = vunpack.c.0.s8 %v785
        %v787 = vlaneseq
        %v788 = vshrl.u32 %v787, 7
        %v789 = vsub.s32 %v786, %v788
        %v790 = vrot.slane %v776, %v789
        %v791 = vcombine.high %v783, %v783
        %v792 = vcombine.high %v790, %v790
        %v793 = vcombine.high %v697, %v697
        %v795 = vunpack.c.l.s4 1983009808
        %v796 = vunpack.c.0.s8 %v795
        %v797 = vlaneseq
        %v798 = vshrl.u32 %v797, 7
        %v799 = vsub.s32 %v796, %v798
        %v800 = vrot.slane %v697, %v799
        %v802 = vunpack.c.l.s4 1983009808
        %v803 = vunpack.c.0.s8 %v802
        %v804 = vlaneseq
        %v805 = vshrl.u32 %v804, 7
        %v806 = vsub.s32 %v803, %v805
        %v807 = vrot.slane %v793, %v806
        %v808 = vcombine.high %v800, %v800
        %v809 = vcombine.high %v807, %v807
        %v810 = vcombine.high %v698, %v698
        %v812 = vunpack.c.l.s4 1983009808
        %v813 = vunpack.c.0.s8 %v812
        %v814 = vlaneseq
        %v815 = vshrl.u32 %v814, 7
        %v816 = vsub.s32 %v813, %v815
        %v817 = vrot.slane %v698, %v816
        %v819 = vunpack.c.l.s4 1983009808
        %v820 = vunpack.c.0.s8 %v819
        %v821 = vlaneseq
        %v822 = vshrl.u32 %v821, 7
        %v823 = vsub.s32 %v820, %v822
        %v824 = vrot.slane %v810, %v823
        %v825 = vcombine.high %v817, %v817
        %v826 = vcombine.high %v824, %v824
        %v827 = vcombine.high %v699, %v699
        %v829 = vunpack.c.l.s4 1983009808
        %v830 = vunpack.c.0.s8 %v829
        %v831 = vlaneseq
        %v832 = vshrl.u32 %v831, 7
        %v833 = vsub.s32 %v830, %v832
        %v834 = vrot.slane %v699, %v833
        %v836 = vunpack.c.l.s4 1983009808
        %v837 = vunpack.c.0.s8 %v836
        %v838 = vlaneseq
        %v839 = vshrl.u32 %v838, 7
        %v840 = vsub.s32 %v837, %v839
        %v841 = vrot.slane %v827, %v840
        %v842 = vcombine.high %v834, %v834
        %v843 = vcombine.high %v841, %v841
        %v844 = vcombine.high %v700, %v700
        %v846 = vunpack.c.l.s4 1983009808
        %v847 = vunpack.c.0.s8 %v846
        %v848 = vlaneseq
        %v849 = vshrl.u32 %v848, 7
        %v850 = vsub.s32 %v847, %v849
        %v851 = vrot.slane %v700, %v850
        %v853 = vunpack.c.l.s4 1983009808
        %v854 = vunpack.c.0.s8 %v853
        %v855 = vlaneseq
        %v856 = vshrl.u32 %v855, 7
        %v857 = vsub.s32 %v854, %v856
        %v858 = vrot.slane %v844, %v857
        %v859 = vcombine.high %v851, %v851
        %v860 = vcombine.high %v858, %v858
        %v861 = vcombine.high %v701, %v701
        %v863 = vunpack.c.l.s4 1983009808
        %v864 = vunpack.c.0.s8 %v863
        %v865 = vlaneseq
        %v866 = vshrl.u32 %v865, 7
        %v867 = vsub.s32 %v864, %v866
        %v868 = vrot.slane %v701, %v867
        %v870 = vunpack.c.l.s4 1983009808
        %v871 = vunpack.c.0.s8 %v870
        %v872 = vlaneseq
        %v873 = vshrl.u32 %v872, 7
        %v874 = vsub.s32 %v871, %v873
        %v875 = vrot.slane %v861, %v874
        %v876 = vcombine.high %v868, %v868
        %v877 = vcombine.high %v875, %v875
        %v878 = vcombine.high %v702, %v702
        %v880 = vunpack.c.l.s4 1983009808
        %v881 = vunpack.c.0.s8 %v880
        %v882 = vlaneseq
        %v883 = vshrl.u32 %v882, 7
        %v884 = vsub.s32 %v881, %v883
        %v885 = vrot.slane %v702, %v884
        %v887 = vunpack.c.l.s4 1983009808
        %v888 = vunpack.c.0.s8 %v887
        %v889 = vlaneseq
        %v890 = vshrl.u32 %v889, 7
        %v891 = vsub.s32 %v888, %v890
        %v892 = vrot.slane %v878, %v891
        %v893 = vcombine.high %v885, %v885
        %v894 = vcombine.high %v892, %v892
        %v895 = vcombine.high %v703, %v703
        %v897 = vunpack.c.l.s4 1983009808
        %v898 = vunpack.c.0.s8 %v897
        %v899 = vlaneseq
        %v900 = vshrl.u32 %v899, 7
        %v901 = vsub.s32 %v898, %v900
        %v902 = vrot.slane %v703, %v901
        %v904 = vunpack.c.l.s4 1983009808
        %v905 = vunpack.c.0.s8 %v904
        %v906 = vlaneseq
        %v907 = vshrl.u32 %v906, 7
        %v908 = vsub.s32 %v905, %v907
        %v909 = vrot.slane %v895, %v908
        %v910 = vcombine.high %v902, %v902
        %v911 = vcombine.high %v909, %v909
        %v912 = vcombine.high %v704, %v704
        %v914 = vunpack.c.l.s4 1983009808
        %v915 = vunpack.c.0.s8 %v914
        %v916 = vlaneseq
        %v917 = vshrl.u32 %v916, 7
        %v918 = vsub.s32 %v915, %v917
        %v919 = vrot.slane %v704, %v918
        %v921 = vunpack.c.l.s4 1983009808
        %v922 = vunpack.c.0.s8 %v921
        %v923 = vlaneseq
        %v924 = vshrl.u32 %v923, 7
        %v925 = vsub.s32 %v922, %v924
        %v926 = vrot.slane %v912, %v925
        %v927 = vcombine.high %v919, %v919
        %v928 = vcombine.high %v926, %v926
        %v929 = vcombine.high %v705, %v705
        %v931 = vunpack.c.l.s4 1983009808
        %v932 = vunpack.c.0.s8 %v931
        %v933 = vlaneseq
        %v934 = vshrl.u32 %v933, 7
        %v935 = vsub.s32 %v932, %v934
        %v936 = vrot.slane %v705, %v935
        %v938 = vunpack.c.l.s4 1983009808
        %v939 = vunpack.c.0.s8 %v938
        %v940 = vlaneseq
        %v941 = vshrl.u32 %v940, 7
        %v942 = vsub.s32 %v939, %v941
        %v943 = vrot.slane %v929, %v942
        %v944 = vcombine.high %v936, %v936
        %v945 = vcombine.high %v943, %v943
        %v946 = vcombine.high %v706, %v706
        %v948 = vunpack.c.l.s4 1983009808
        %v949 = vunpack.c.0.s8 %v948
        %v950 = vlaneseq
        %v951 = vshrl.u32 %v950, 7
        %v952 = vsub.s32 %v949, %v951
        %v953 = vrot.slane %v706, %v952
        %v955 = vunpack.c.l.s4 1983009808
        %v956 = vunpack.c.0.s8 %v955
        %v957 = vlaneseq
        %v958 = vshrl.u32 %v957, 7
        %v959 = vsub.s32 %v956, %v958
        %v960 = vrot.slane %v946, %v959
        %v961 = vcombine.high %v953, %v953
        %v962 = vcombine.high %v960, %v960
        %v963 = vcombine.high %v707, %v707
        %v965 = vunpack.c.l.s4 1983009808
        %v966 = vunpack.c.0.s8 %v965
        %v967 = vlaneseq
        %v968 = vshrl.u32 %v967, 7
        %v969 = vsub.s32 %v966, %v968
        %v970 = vrot.slane %v707, %v969
        %v972 = vunpack.c.l.s4 1983009808
        %v973 = vunpack.c.0.s8 %v972
        %v974 = vlaneseq
        %v975 = vshrl.u32 %v974, 7
        %v976 = vsub.s32 %v973, %v975
        %v977 = vrot.slane %v963, %v976
        %v978 = vcombine.high %v970, %v970
        %v979 = vcombine.high %v977, %v977
        %v980 = vcombine.high %v708, %v708
        %v982 = vunpack.c.l.s4 1983009808
        %v983 = vunpack.c.0.s8 %v982
        %v984 = vlaneseq
        %v985 = vshrl.u32 %v984, 7
        %v986 = vsub.s32 %v983, %v985
        %v987 = vrot.slane %v708, %v986
        %v989 = vunpack.c.l.s4 1983009808
        %v990 = vunpack.c.0.s8 %v989
        %v991 = vlaneseq
        %v992 = vshrl.u32 %v991, 7
        %v993 = vsub.s32 %v990, %v992
        %v994 = vrot.slane %v980, %v993
        %v995 = vcombine.high %v987, %v987
        %v996 = vcombine.high %v994, %v994
        %v1061 = vrot.slane %v732, 7
        %v1062 = vrot.slane %v1061, 2
        %v1063 = vrot.slane %v740, 7
        %v1064 = vrot.slane %v1063, 2
        %v1065 = vrot.slane %v739, 7
        %v1066 = vrot.slane %v1065, 2
        %v1067 = vrot.slane %v741, 7
        %v1068 = vrot.slane %v1067, 2
        %v1069 = vrot.slane %v749, 7
        %v1070 = vrot.slane %v1069, 2
        %v1071 = vrot.slane %v757, 7
        %v1072 = vrot.slane %v1071, 2
        %v1073 = vrot.slane %v756, 7
        %v1074 = vrot.slane %v1073, 2
        %v1075 = vrot.slane %v758, 7
        %v1076 = vrot.slane %v1075, 2
        %v1077 = vrot.slane %v766, 7
        %v1078 = vrot.slane %v1077, 2
        %v1079 = vrot.slane %v774, 7
        %v1080 = vrot.slane %v1079, 2
        %v1081 = vrot.slane %v773, 7
        %v1082 = vrot.slane %v1081, 2
        %v1083 = vrot.slane %v775, 7
        %v1084 = vrot.slane %v1083, 2
        %v1085 = vrot.slane %v783, 7
        %v1086 = vrot.slane %v1085, 2
        %v1087 = vrot.slane %v791, 7
        %v1088 = vrot.slane %v1087, 2
        %v1089 = vrot.slane %v790, 7
        %v1090 = vrot.slane %v1089, 2
        %v1091 = vrot.slane %v792, 7
        %v1092 = vrot.slane %v1091, 2
        %v1093 = vrot.slane %v800, 7
        %v1094 = vrot.slane %v1093, 2
        %v1095 = vrot.slane %v808, 7
        %v1096 = vrot.slane %v1095, 2
        %v1097 = vrot.slane %v807, 7
        %v1098 = vrot.slane %v1097, 2
        %v1099 = vrot.slane %v809, 7
        %v1100 = vrot.slane %v1099, 2
        %v1101 = vrot.slane %v817, 7
        %v1102 = vrot.slane %v1101, 2
        %v1103 = vrot.slane %v825, 7
        %v1104 = vrot.slane %v1103, 2
        %v1105 = vrot.slane %v824, 7
        %v1106 = vrot.slane %v1105, 2
        %v1107 = vrot.slane %v826, 7
        %v1108 = vrot.slane %v1107, 2
        %v1109 = vrot.slane %v834, 7
        %v1110 = vrot.slane %v1109, 2
        %v1111 = vrot.slane %v842, 7
        %v1112 = vrot.slane %v1111, 2
        %v1113 = vrot.slane %v841, 7
        %v1114 = vrot.slane %v1113, 2
        %v1115 = vrot.slane %v843, 7
        %v1116 = vrot.slane %v1115, 2
        %v1117 = vrot.slane %v851, 7
        %v1118 = vrot.slane %v1117, 2
        %v1119 = vrot.slane %v859, 7
        %v1120 = vrot.slane %v1119, 2
        %v1121 = vrot.slane %v858, 7
        %v1122 = vrot.slane %v1121, 2
        %v1123 = vrot.slane %v860, 7
        %v1124 = vrot.slane %v1123, 2
        %v1125 = vrot.slane %v868, 7
        %v1126 = vrot.slane %v1125, 2
        %v1127 = vrot.slane %v876, 7
        %v1128 = vrot.slane %v1127, 2
        %v1129 = vrot.slane %v875, 7
        %v1130 = vrot.slane %v1129, 2
        %v1131 = vrot.slane %v877, 7
        %v1132 = vrot.slane %v1131, 2
        %v1133 = vrot.slane %v885, 7
        %v1134 = vrot.slane %v1133, 2
        %v1135 = vrot.slane %v893, 7
        %v1136 = vrot.slane %v1135, 2
        %v1137 = vrot.slane %v892, 7
        %v1138 = vrot.slane %v1137, 2
        %v1139 = vrot.slane %v894, 7
        %v1140 = vrot.slane %v1139, 2
        %v1141 = vrot.slane %v902, 7
        %v1142 = vrot.slane %v1141, 2
        %v1143 = vrot.slane %v910, 7
        %v1144 = vrot.slane %v1143, 2
        %v1145 = vrot.slane %v909, 7
        %v1146 = vrot.slane %v1145, 2
        %v1147 = vrot.slane %v911, 7
        %v1148 = vrot.slane %v1147, 2
        %v1149 = vrot.slane %v919, 7
        %v1150 = vrot.slane %v1149, 2
        %v1151 = vrot.slane %v927, 7
        %v1152 = vrot.slane %v1151, 2
        %v1153 = vrot.slane %v926, 7
        %v1154 = vrot.slane %v1153, 2
        %v1155 = vrot.slane %v928, 7
        %v1156 = vrot.slane %v1155, 2
        %v1157 = vrot.slane %v936, 7
        %v1158 = vrot.slane %v1157, 2
        %v1159 = vrot.slane %v944, 7
        %v1160 = vrot.slane %v1159, 2
        %v1161 = vrot.slane %v943, 7
        %v1162 = vrot.slane %v1161, 2
        %v1163 = vrot.slane %v945, 7
        %v1164 = vrot.slane %v1163, 2
        %v1165 = vrot.slane %v953, 7
        %v1166 = vrot.slane %v1165, 2
        %v1167 = vrot.slane %v961, 7
        %v1168 = vrot.slane %v1167, 2
        %v1169 = vrot.slane %v960, 7
        %v1170 = vrot.slane %v1169, 2
        %v1171 = vrot.slane %v962, 7
        %v1172 = vrot.slane %v1171, 2
        %v1173 = vrot.slane %v970, 7
        %v1174 = vrot.slane %v1173, 2
        %v1175 = vrot.slane %v978, 7
        %v1176 = vrot.slane %v1175, 2
        %v1177 = vrot.slane %v977, 7
        %v1178 = vrot.slane %v1177, 2
        %v1179 = vrot.slane %v979, 7
        %v1180 = vrot.slane %v1179, 2
        %v1181 = vrot.slane %v987, 7
        %v1182 = vrot.slane %v1181, 2
        %v1183 = vrot.slane %v995, 7
        %v1184 = vrot.slane %v1183, 2
        %v1185 = vrot.slane %v994, 7
        %v1186 = vrot.slane %v1185, 2
        %v1187 = vrot.slane %v996, 7
        %v1188 = vrot.slane %v1187, 2
        %v1253 = vmax.f32 %v732, %v1062
        %v1254 = vmax.f32 %v740, %v1064
        %v1255 = vmax.f32 %v739, %v1066
        %v1256 = vmax.f32 %v741, %v1068
        %v1257 = vmax.f32 %v749, %v1070
        %v1258 = vmax.f32 %v757, %v1072
        %v1259 = vmax.f32 %v756, %v1074
        %v1260 = vmax.f32 %v758, %v1076
        %v1261 = vmax.f32 %v766, %v1078
        %v1262 = vmax.f32 %v774, %v1080
        %v1263 = vmax.f32 %v773, %v1082
        %v1264 = vmax.f32 %v775, %v1084
        %v1265 = vmax.f32 %v783, %v1086
        %v1266 = vmax.f32 %v791, %v1088
        %v1267 = vmax.f32 %v790, %v1090
        %v1268 = vmax.f32 %v792, %v1092
        %v1269 = vmax.f32 %v800, %v1094
        %v1270 = vmax.f32 %v808, %v1096
        %v1271 = vmax.f32 %v807, %v1098
        %v1272 = vmax.f32 %v809, %v1100
        %v1273 = vmax.f32 %v817, %v1102
        %v1274 = vmax.f32 %v825, %v1104
        %v1275 = vmax.f32 %v824, %v1106
        %v1276 = vmax.f32 %v826, %v1108
        %v1277 = vmax.f32 %v834, %v1110
        %v1278 = vmax.f32 %v842, %v1112
        %v1279 = vmax.f32 %v841, %v1114
        %v1280 = vmax.f32 %v843, %v1116
        %v1281 = vmax.f32 %v851, %v1118
        %v1282 = vmax.f32 %v859, %v1120
        %v1283 = vmax.f32 %v858, %v1122
        %v1284 = vmax.f32 %v860, %v1124
        %v1285 = vmax.f32 %v868, %v1126
        %v1286 = vmax.f32 %v876, %v1128
        %v1287 = vmax.f32 %v875, %v1130
        %v1288 = vmax.f32 %v877, %v1132
        %v1289 = vmax.f32 %v885, %v1134
        %v1290 = vmax.f32 %v893, %v1136
        %v1291 = vmax.f32 %v892, %v1138
        %v1292 = vmax.f32 %v894, %v1140
        %v1293 = vmax.f32 %v902, %v1142
        %v1294 = vmax.f32 %v910, %v1144
        %v1295 = vmax.f32 %v909, %v1146
        %v1296 = vmax.f32 %v911, %v1148
        %v1297 = vmax.f32 %v919, %v1150
        %v1298 = vmax.f32 %v927, %v1152
        %v1299 = vmax.f32 %v926, %v1154
        %v1300 = vmax.f32 %v928, %v1156
        %v1301 = vmax.f32 %v936, %v1158
        %v1302 = vmax.f32 %v944, %v1160
        %v1303 = vmax.f32 %v943, %v1162
        %v1304 = vmax.f32 %v945, %v1164
        %v1305 = vmax.f32 %v953, %v1166
        %v1306 = vmax.f32 %v961, %v1168
        %v1307 = vmax.f32 %v960, %v1170
        %v1308 = vmax.f32 %v962, %v1172
        %v1309 = vmax.f32 %v970, %v1174
        %v1310 = vmax.f32 %v978, %v1176
        %v1311 = vmax.f32 %v977, %v1178
        %v1312 = vmax.f32 %v979, %v1180
        %v1313 = vmax.f32 %v987, %v1182
        %v1314 = vmax.f32 %v995, %v1184
        %v1315 = vmax.f32 %v994, %v1186
        %v1316 = vmax.f32 %v996, %v1188
        %v1317 = vpack.c.bf16 %v1253, %v1253
        %v1318 = vpack.c.bf16 %v1254, %v1254
        %v1319 = vpack.c.bf16 %v1255, %v1255
        %v1320 = vpack.c.bf16 %v1256, %v1256
        %v1321 = vpack.c.bf16 %v1257, %v1257
        %v1322 = vpack.c.bf16 %v1258, %v1258
        %v1323 = vpack.c.bf16 %v1259, %v1259
        %v1324 = vpack.c.bf16 %v1260, %v1260
        %v1325 = vpack.c.bf16 %v1261, %v1261
        %v1326 = vpack.c.bf16 %v1262, %v1262
        %v1327 = vpack.c.bf16 %v1263, %v1263
        %v1328 = vpack.c.bf16 %v1264, %v1264
        %v1329 = vpack.c.bf16 %v1265, %v1265
        %v1330 = vpack.c.bf16 %v1266, %v1266
        %v1331 = vpack.c.bf16 %v1267, %v1267
        %v1332 = vpack.c.bf16 %v1268, %v1268
        %v1333 = vpack.c.bf16 %v1269, %v1269
        %v1334 = vpack.c.bf16 %v1270, %v1270
        %v1335 = vpack.c.bf16 %v1271, %v1271
        %v1336 = vpack.c.bf16 %v1272, %v1272
        %v1337 = vpack.c.bf16 %v1273, %v1273
        %v1338 = vpack.c.bf16 %v1274, %v1274
        %v1339 = vpack.c.bf16 %v1275, %v1275
        %v1340 = vpack.c.bf16 %v1276, %v1276
        %v1341 = vpack.c.bf16 %v1277, %v1277
        %v1342 = vpack.c.bf16 %v1278, %v1278
        %v1343 = vpack.c.bf16 %v1279, %v1279
        %v1344 = vpack.c.bf16 %v1280, %v1280
        %v1345 = vpack.c.bf16 %v1281, %v1281
        %v1346 = vpack.c.bf16 %v1282, %v1282
        %v1347 = vpack.c.bf16 %v1283, %v1283
        %v1348 = vpack.c.bf16 %v1284, %v1284
        %v1349 = vpack.c.bf16 %v1285, %v1285
        %v1350 = vpack.c.bf16 %v1286, %v1286
        %v1351 = vpack.c.bf16 %v1287, %v1287
        %v1352 = vpack.c.bf16 %v1288, %v1288
        %v1353 = vpack.c.bf16 %v1289, %v1289
        %v1354 = vpack.c.bf16 %v1290, %v1290
        %v1355 = vpack.c.bf16 %v1291, %v1291
        %v1356 = vpack.c.bf16 %v1292, %v1292
        %v1357 = vpack.c.bf16 %v1293, %v1293
        %v1358 = vpack.c.bf16 %v1294, %v1294
        %v1359 = vpack.c.bf16 %v1295, %v1295
        %v1360 = vpack.c.bf16 %v1296, %v1296
        %v1361 = vpack.c.bf16 %v1297, %v1297
        %v1362 = vpack.c.bf16 %v1298, %v1298
        %v1363 = vpack.c.bf16 %v1299, %v1299
        %v1364 = vpack.c.bf16 %v1300, %v1300
        %v1365 = vpack.c.bf16 %v1301, %v1301
        %v1366 = vpack.c.bf16 %v1302, %v1302
        %v1367 = vpack.c.bf16 %v1303, %v1303
        %v1368 = vpack.c.bf16 %v1304, %v1304
        %v1369 = vpack.c.bf16 %v1305, %v1305
        %v1370 = vpack.c.bf16 %v1306, %v1306
        %v1371 = vpack.c.bf16 %v1307, %v1307
        %v1372 = vpack.c.bf16 %v1308, %v1308
        %v1373 = vpack.c.bf16 %v1309, %v1309
        %v1374 = vpack.c.bf16 %v1310, %v1310
        %v1375 = vpack.c.bf16 %v1311, %v1311
        %v1376 = vpack.c.bf16 %v1312, %v1312
        %v1377 = vpack.c.bf16 %v1313, %v1313
        %v1378 = vpack.c.bf16 %v1314, %v1314
        %v1379 = vpack.c.bf16 %v1315, %v1315
        %v1380 = vpack.c.bf16 %v1316, %v1316
        %v1445 = vunpack.c.l.b16 %v1317
        %v1446 = vunpack.c.l.b16 %v1318
        %v1447 = vunpack.c.l.b16 %v1319
        %v1448 = vunpack.c.l.b16 %v1320
        %v1449 = vunpack.c.l.b16 %v1321
        %v1450 = vunpack.c.l.b16 %v1322
        %v1451 = vunpack.c.l.b16 %v1323
        %v1452 = vunpack.c.l.b16 %v1324
        %v1453 = vunpack.c.l.b16 %v1325
        %v1454 = vunpack.c.l.b16 %v1326
        %v1455 = vunpack.c.l.b16 %v1327
        %v1456 = vunpack.c.l.b16 %v1328
        %v1457 = vunpack.c.l.b16 %v1329
        %v1458 = vunpack.c.l.b16 %v1330
        %v1459 = vunpack.c.l.b16 %v1331
        %v1460 = vunpack.c.l.b16 %v1332
        %v1461 = vunpack.c.l.b16 %v1333
        %v1462 = vunpack.c.l.b16 %v1334
        %v1463 = vunpack.c.l.b16 %v1335
        %v1464 = vunpack.c.l.b16 %v1336
        %v1465 = vunpack.c.l.b16 %v1337
        %v1466 = vunpack.c.l.b16 %v1338
        %v1467 = vunpack.c.l.b16 %v1339
        %v1468 = vunpack.c.l.b16 %v1340
        %v1469 = vunpack.c.l.b16 %v1341
        %v1470 = vunpack.c.l.b16 %v1342
        %v1471 = vunpack.c.l.b16 %v1343
        %v1472 = vunpack.c.l.b16 %v1344
        %v1473 = vunpack.c.l.b16 %v1345
        %v1474 = vunpack.c.l.b16 %v1346
        %v1475 = vunpack.c.l.b16 %v1347
        %v1476 = vunpack.c.l.b16 %v1348
        %v1477 = vunpack.c.l.b16 %v1349
        %v1478 = vunpack.c.l.b16 %v1350
        %v1479 = vunpack.c.l.b16 %v1351
        %v1480 = vunpack.c.l.b16 %v1352
        %v1481 = vunpack.c.l.b16 %v1353
        %v1482 = vunpack.c.l.b16 %v1354
        %v1483 = vunpack.c.l.b16 %v1355
        %v1484 = vunpack.c.l.b16 %v1356
        %v1485 = vunpack.c.l.b16 %v1357
        %v1486 = vunpack.c.l.b16 %v1358
        %v1487 = vunpack.c.l.b16 %v1359
        %v1488 = vunpack.c.l.b16 %v1360
        %v1489 = vunpack.c.l.b16 %v1361
        %v1490 = vunpack.c.l.b16 %v1362
        %v1491 = vunpack.c.l.b16 %v1363
        %v1492 = vunpack.c.l.b16 %v1364
        %v1493 = vunpack.c.l.b16 %v1365
        %v1494 = vunpack.c.l.b16 %v1366
        %v1495 = vunpack.c.l.b16 %v1367
        %v1496 = vunpack.c.l.b16 %v1368
        %v1497 = vunpack.c.l.b16 %v1369
        %v1498 = vunpack.c.l.b16 %v1370
        %v1499 = vunpack.c.l.b16 %v1371
        %v1500 = vunpack.c.l.b16 %v1372
        %v1501 = vunpack.c.l.b16 %v1373
        %v1502 = vunpack.c.l.b16 %v1374
        %v1503 = vunpack.c.l.b16 %v1375
        %v1504 = vunpack.c.l.b16 %v1376
        %v1505 = vunpack.c.l.b16 %v1377
        %v1506 = vunpack.c.l.b16 %v1378
        %v1507 = vunpack.c.l.b16 %v1379
        %v1508 = vunpack.c.l.b16 %v1380
        %v1509 = vpack.c.b16 %v1445, %v1445
        %v1510 = vpack.c.b16 %v1446, %v1446
        %v1511 = vpack.c.b16 %v1447, %v1447
        %v1512 = vpack.c.b16 %v1448, %v1448
        %v1513 = vpack.c.b16 %v1449, %v1449
        %v1514 = vpack.c.b16 %v1450, %v1450
        %v1515 = vpack.c.b16 %v1451, %v1451
        %v1516 = vpack.c.b16 %v1452, %v1452
        %v1517 = vpack.c.b16 %v1453, %v1453
        %v1518 = vpack.c.b16 %v1454, %v1454
        %v1519 = vpack.c.b16 %v1455, %v1455
        %v1520 = vpack.c.b16 %v1456, %v1456
        %v1521 = vpack.c.b16 %v1457, %v1457
        %v1522 = vpack.c.b16 %v1458, %v1458
        %v1523 = vpack.c.b16 %v1459, %v1459
        %v1524 = vpack.c.b16 %v1460, %v1460
        %v1525 = vpack.c.b16 %v1461, %v1461
        %v1526 = vpack.c.b16 %v1462, %v1462
        %v1527 = vpack.c.b16 %v1463, %v1463
        %v1528 = vpack.c.b16 %v1464, %v1464
        %v1529 = vpack.c.b16 %v1465, %v1465
        %v1530 = vpack.c.b16 %v1466, %v1466
        %v1531 = vpack.c.b16 %v1467, %v1467
        %v1532 = vpack.c.b16 %v1468, %v1468
        %v1533 = vpack.c.b16 %v1469, %v1469
        %v1534 = vpack.c.b16 %v1470, %v1470
        %v1535 = vpack.c.b16 %v1471, %v1471
        %v1536 = vpack.c.b16 %v1472, %v1472
        %v1537 = vpack.c.b16 %v1473, %v1473
        %v1538 = vpack.c.b16 %v1474, %v1474
        %v1539 = vpack.c.b16 %v1475, %v1475
        %v1540 = vpack.c.b16 %v1476, %v1476
        %v1541 = vpack.c.b16 %v1477, %v1477
        %v1542 = vpack.c.b16 %v1478, %v1478
        %v1543 = vpack.c.b16 %v1479, %v1479
        %v1544 = vpack.c.b16 %v1480, %v1480
        %v1545 = vpack.c.b16 %v1481, %v1481
        %v1546 = vpack.c.b16 %v1482, %v1482
        %v1547 = vpack.c.b16 %v1483, %v1483
        %v1548 = vpack.c.b16 %v1484, %v1484
        %v1549 = vpack.c.b16 %v1485, %v1485
        %v1550 = vpack.c.b16 %v1486, %v1486
        %v1551 = vpack.c.b16 %v1487, %v1487
        %v1552 = vpack.c.b16 %v1488, %v1488
        %v1553 = vpack.c.b16 %v1489, %v1489
        %v1554 = vpack.c.b16 %v1490, %v1490
        %v1555 = vpack.c.b16 %v1491, %v1491
        %v1556 = vpack.c.b16 %v1492, %v1492
        %v1557 = vpack.c.b16 %v1493, %v1493
        %v1558 = vpack.c.b16 %v1494, %v1494
        %v1559 = vpack.c.b16 %v1495, %v1495
        %v1560 = vpack.c.b16 %v1496, %v1496
        %v1561 = vpack.c.b16 %v1497, %v1497
        %v1562 = vpack.c.b16 %v1498, %v1498
        %v1563 = vpack.c.b16 %v1499, %v1499
        %v1564 = vpack.c.b16 %v1500, %v1500
        %v1565 = vpack.c.b16 %v1501, %v1501
        %v1566 = vpack.c.b16 %v1502, %v1502
        %v1567 = vpack.c.b16 %v1503, %v1503
        %v1568 = vpack.c.b16 %v1504, %v1504
        %v1569 = vpack.c.b16 %v1505, %v1505
        %v1570 = vpack.c.b16 %v1506, %v1506
        %v1571 = vpack.c.b16 %v1507, %v1507
        %v1572 = vpack.c.b16 %v1508, %v1508
        %v1573 = vunpack.c.l.b16 %v1509
        %v1574 = vunpack.c.l.b16 %v1510
        %v1575 = vunpack.c.l.b16 %v1511
        %v1576 = vunpack.c.l.b16 %v1512
        %v1577 = vunpack.c.l.b16 %v1513
        %v1578 = vunpack.c.l.b16 %v1514
        %v1579 = vunpack.c.l.b16 %v1515
        %v1580 = vunpack.c.l.b16 %v1516
        %v1581 = vunpack.c.l.b16 %v1517
        %v1582 = vunpack.c.l.b16 %v1518
        %v1583 = vunpack.c.l.b16 %v1519
        %v1584 = vunpack.c.l.b16 %v1520
        %v1585 = vunpack.c.l.b16 %v1521
        %v1586 = vunpack.c.l.b16 %v1522
        %v1587 = vunpack.c.l.b16 %v1523
        %v1588 = vunpack.c.l.b16 %v1524
        %v1589 = vunpack.c.l.b16 %v1525
        %v1590 = vunpack.c.l.b16 %v1526
        %v1591 = vunpack.c.l.b16 %v1527
        %v1592 = vunpack.c.l.b16 %v1528
        %v1593 = vunpack.c.l.b16 %v1529
        %v1594 = vunpack.c.l.b16 %v1530
        %v1595 = vunpack.c.l.b16 %v1531
        %v1596 = vunpack.c.l.b16 %v1532
        %v1597 = vunpack.c.l.b16 %v1533
        %v1598 = vunpack.c.l.b16 %v1534
        %v1599 = vunpack.c.l.b16 %v1535
        %v1600 = vunpack.c.l.b16 %v1536
        %v1601 = vunpack.c.l.b16 %v1537
        %v1602 = vunpack.c.l.b16 %v1538
        %v1603 = vunpack.c.l.b16 %v1539
        %v1604 = vunpack.c.l.b16 %v1540
        %v1605 = vunpack.c.l.b16 %v1541
        %v1606 = vunpack.c.l.b16 %v1542
        %v1607 = vunpack.c.l.b16 %v1543
        %v1608 = vunpack.c.l.b16 %v1544
        %v1609 = vunpack.c.l.b16 %v1545
        %v1610 = vunpack.c.l.b16 %v1546
        %v1611 = vunpack.c.l.b16 %v1547
        %v1612 = vunpack.c.l.b16 %v1548
        %v1613 = vunpack.c.l.b16 %v1549
        %v1614 = vunpack.c.l.b16 %v1550
        %v1615 = vunpack.c.l.b16 %v1551
        %v1616 = vunpack.c.l.b16 %v1552
        %v1617 = vunpack.c.l.b16 %v1553
        %v1618 = vunpack.c.l.b16 %v1554
        %v1619 = vunpack.c.l.b16 %v1555
        %v1620 = vunpack.c.l.b16 %v1556
        %v1621 = vunpack.c.l.b16 %v1557
        %v1622 = vunpack.c.l.b16 %v1558
        %v1623 = vunpack.c.l.b16 %v1559
        %v1624 = vunpack.c.l.b16 %v1560
        %v1625 = vunpack.c.l.b16 %v1561
        %v1626 = vunpack.c.l.b16 %v1562
        %v1627 = vunpack.c.l.b16 %v1563
        %v1628 = vunpack.c.l.b16 %v1564
        %v1629 = vunpack.c.l.b16 %v1565
        %v1630 = vunpack.c.l.b16 %v1566
        %v1631 = vunpack.c.l.b16 %v1567
        %v1632 = vunpack.c.l.b16 %v1568
        %v1633 = vunpack.c.l.b16 %v1569
        %v1634 = vunpack.c.l.b16 %v1570
        %v1635 = vunpack.c.l.b16 %v1571
        %v1636 = vunpack.c.l.b16 %v1572
        %v1637 = vrot.slane %v1574, 7
        %vm1638 = vcmask 1041409
        %v1639 = vsel %vm1638, %v1637, %v1573
        %v1640 = vrot.slane %v1575, 6
        %vm1641 = vcmask 1042434
        %v1642 = vsel %vm1641, %v1640, %v1639
        %v1643 = vrot.slane %v1576, 5
        %vm1644 = vcmask 1043459
        %v1645 = vsel %vm1644, %v1643, %v1642
        %v1646 = vrot.slane %v1577, 4
        %vm1647 = vcmask 1044484
        %v1648 = vsel %vm1647, %v1646, %v1645
        %v1649 = vrot.slane %v1578, 3
        %vm1650 = vcmask 1045509
        %v1651 = vsel %vm1650, %v1649, %v1648
        %v1652 = vrot.slane %v1579, 2
        %vm1653 = vcmask 1046534
        %v1654 = vsel %vm1653, %v1652, %v1651
        %v1655 = vrot.slane %v1580, 1
        %vm1656 = vcmask 1047559
        %v1657 = vsel %vm1656, %v1655, %v1654
        %v1658 = vrot.slane %v1582, 7
        %v1659 = vsel %vm1638, %v1658, %v1581
        %v1660 = vrot.slane %v1583, 6
        %v1661 = vsel %vm1641, %v1660, %v1659
        %v1662 = vrot.slane %v1584, 5
        %v1663 = vsel %vm1644, %v1662, %v1661
        %v1664 = vrot.slane %v1585, 4
        %v1665 = vsel %vm1647, %v1664, %v1663
        %v1666 = vrot.slane %v1586, 3
        %v1667 = vsel %vm1650, %v1666, %v1665
        %v1668 = vrot.slane %v1587, 2
        %v1669 = vsel %vm1653, %v1668, %v1667
        %v1670 = vrot.slane %v1588, 1
        %v1671 = vsel %vm1656, %v1670, %v1669
        %v1672 = vrot.slane %v1590, 7
        %v1673 = vsel %vm1638, %v1672, %v1589
        %v1674 = vrot.slane %v1591, 6
        %v1675 = vsel %vm1641, %v1674, %v1673
        %v1676 = vrot.slane %v1592, 5
        %v1677 = vsel %vm1644, %v1676, %v1675
        %v1678 = vrot.slane %v1593, 4
        %v1679 = vsel %vm1647, %v1678, %v1677
        %v1680 = vrot.slane %v1594, 3
        %v1681 = vsel %vm1650, %v1680, %v1679
        %v1682 = vrot.slane %v1595, 2
        %v1683 = vsel %vm1653, %v1682, %v1681
        %v1684 = vrot.slane %v1596, 1
        %v1685 = vsel %vm1656, %v1684, %v1683
        %v1686 = vrot.slane %v1598, 7
        %v1687 = vsel %vm1638, %v1686, %v1597
        %v1688 = vrot.slane %v1599, 6
        %v1689 = vsel %vm1641, %v1688, %v1687
        %v1690 = vrot.slane %v1600, 5
        %v1691 = vsel %vm1644, %v1690, %v1689
        %v1692 = vrot.slane %v1601, 4
        %v1693 = vsel %vm1647, %v1692, %v1691
        %v1694 = vrot.slane %v1602, 3
        %v1695 = vsel %vm1650, %v1694, %v1693
        %v1696 = vrot.slane %v1603, 2
        %v1697 = vsel %vm1653, %v1696, %v1695
        %v1698 = vrot.slane %v1604, 1
        %v1699 = vsel %vm1656, %v1698, %v1697
        %v1700 = vrot.slane %v1606, 7
        %v1701 = vsel %vm1638, %v1700, %v1605
        %v1702 = vrot.slane %v1607, 6
        %v1703 = vsel %vm1641, %v1702, %v1701
        %v1704 = vrot.slane %v1608, 5
        %v1705 = vsel %vm1644, %v1704, %v1703
        %v1706 = vrot.slane %v1609, 4
        %v1707 = vsel %vm1647, %v1706, %v1705
        %v1708 = vrot.slane %v1610, 3
        %v1709 = vsel %vm1650, %v1708, %v1707
        %v1710 = vrot.slane %v1611, 2
        %v1711 = vsel %vm1653, %v1710, %v1709
        %v1712 = vrot.slane %v1612, 1
        %v1713 = vsel %vm1656, %v1712, %v1711
        %v1714 = vrot.slane %v1614, 7
        %v1715 = vsel %vm1638, %v1714, %v1613
        %v1716 = vrot.slane %v1615, 6
        %v1717 = vsel %vm1641, %v1716, %v1715
        %v1718 = vrot.slane %v1616, 5
        %v1719 = vsel %vm1644, %v1718, %v1717
        %v1720 = vrot.slane %v1617, 4
        %v1721 = vsel %vm1647, %v1720, %v1719
        %v1722 = vrot.slane %v1618, 3
        %v1723 = vsel %vm1650, %v1722, %v1721
        %v1724 = vrot.slane %v1619, 2
        %v1725 = vsel %vm1653, %v1724, %v1723
        %v1726 = vrot.slane %v1620, 1
        %v1727 = vsel %vm1656, %v1726, %v1725
        %v1728 = vrot.slane %v1622, 7
        %v1729 = vsel %vm1638, %v1728, %v1621
        %v1730 = vrot.slane %v1623, 6
        %v1731 = vsel %vm1641, %v1730, %v1729
        %v1732 = vrot.slane %v1624, 5
        %v1733 = vsel %vm1644, %v1732, %v1731
        %v1734 = vrot.slane %v1625, 4
        %v1735 = vsel %vm1647, %v1734, %v1733
        %v1736 = vrot.slane %v1626, 3
        %v1737 = vsel %vm1650, %v1736, %v1735
        %v1738 = vrot.slane %v1627, 2
        %v1739 = vsel %vm1653, %v1738, %v1737
        %v1740 = vrot.slane %v1628, 1
        %v1741 = vsel %vm1656, %v1740, %v1739
        %v1742 = vrot.slane %v1630, 7
        %v1743 = vsel %vm1638, %v1742, %v1629
        %v1744 = vrot.slane %v1631, 6
        %v1745 = vsel %vm1641, %v1744, %v1743
        %v1746 = vrot.slane %v1632, 5
        %v1747 = vsel %vm1644, %v1746, %v1745
        %v1748 = vrot.slane %v1633, 4
        %v1749 = vsel %vm1647, %v1748, %v1747
        %v1750 = vrot.slane %v1634, 3
        %v1751 = vsel %vm1650, %v1750, %v1749
        %v1752 = vrot.slane %v1635, 2
        %v1753 = vsel %vm1653, %v1752, %v1751
        %v1754 = vrot.slane %v1636, 1
        %v1755 = vsel %vm1656, %v1754, %v1753
        %v1756 = vpack.c.b16 %v1657, %v1657
        %v1757 = vpack.c.b16 %v1671, %v1671
        %v1758 = vpack.c.b16 %v1685, %v1685
        %v1759 = vpack.c.b16 %v1699, %v1699
        %v1760 = vpack.c.b16 %v1713, %v1713
        %v1761 = vpack.c.b16 %v1727, %v1727
        %v1762 = vpack.c.b16 %v1741, %v1741
        %v1763 = vpack.c.b16 %v1755, %v1755
        %s1772 = smul.u32 %s238, 8
        %s1773 = smul.addr %s1772, 4
        %s1774 = scalar_lea.vmem %s233, %s1773
        %vm1775 = vcmask 257024
        %1776 = vst.msk [vmem:[%s1774] sm:$0xf] %vm1775, %v1756
        %1777 = vst.msk [vmem:[%s1774 + $0x4] sm:$0xf] %vm1775, %v1757
        %1778 = vst.msk [vmem:[%s1774 + $0x8] sm:$0xf] %vm1775, %v1758
        %1779 = vst.msk [vmem:[%s1774 + $0xc] sm:$0xf] %vm1775, %v1759
        %1780 = vst.msk [vmem:[%s1774 + $0x10] sm:$0xf] %vm1775, %v1760
        %1781 = vst.msk [vmem:[%s1774 + $0x14] sm:$0xf] %vm1775, %v1761
        %1782 = vst.msk [vmem:[%s1774 + $0x18] sm:$0xf] %vm1775, %v1762
        %1783 = vst.msk [vmem:[%s1774 + $0x1c] sm:$0xf] %vm1775, %v1763
      $region41: #{tpu_custom_call.1} parent=35 // loop_footer
        %s242 = sadd.s32 1, %s238
      $region42: #{tpu_custom_call.1} parent=35 // loop_footer_branch
        %237 = sbr.rel target = $region38
      $region43: #{tpu_custom_call.1} parent=35 // loop_exit
        _
      %p1784 = scmp.lt.s32.totalorder %s19, 1
      %s1785 = scalar_select %p1784, %s19, 1
      %p1786 = scmp.lt.s32.totalorder %s20, 0
      %s1787 = scalar_select %p1786, %s20, 0
      %s1788 = smul.addr %s1787, 512
      %s1789 = smul.addr %s1785, 512
      %s1790 = sadd.s32 %s1788, %s1789
      %s1791 = smul.addr %s1790, 4
      %s1792 = scalar_lea.vmem %s4, %s1791
      // Predicated region
      $region44: #{tpu_custom_call.1} parent=35 // pred_check
        %p1793 = pneg %p138
      $region45: #{tpu_custom_call.1} parent=35 // pred_check_branch
        %1795 = sbr.rel (%p1793) target = $region47
      $region46: #{tpu_custom_call.1} parent=35 // pred_region
        _
      $region47: #{tpu_custom_call.1} parent=35 // pred_fallthru
        _
    $region36: #{tpu_custom_call.1} parent=5 // pred_fallthru
      _
    %p1796 = scmp.le.s32.totalorder 2, %s10
    // Predicated region
    $region48: #{tpu_custom_call.1} parent=5 // pred_check
      %p1797 = pneg %p1796
    $region49: #{tpu_custom_call.1} parent=5 // pred_check_branch
      %1799 = sbr.rel (%p1797) target = $region51
    $region50: #{tpu_custom_call.1} parent=5 // pred_region
      %s1800 = ssub.s32 %s10, 2
      // Predicated region
      $region52: #{tpu_custom_call.1} parent=50 // pred_check
        %p1801 = pneg %p144
      $region53: #{tpu_custom_call.1} parent=50 // pred_check_branch
        %1803 = sbr.rel (%p1801) target = $region55
      $region54: #{tpu_custom_call.1} parent=50 // pred_region
        %p1804 = scmp.lt.s32.totalorder %s21, 1
        %s1805 = scalar_select %p1804, %s21, 1
        %p1806 = scmp.lt.s32.totalorder %s22, 0
        %s1807 = scalar_select %p1806, %s22, 0
        %s1808 = smul.addr %s1807, 512
        %s1809 = smul.addr %s1805, 512
        %s1810 = sadd.s32 %s1808, %s1809
        %s1811 = smul.addr %s1810, 4
        %s1812 = scalar_lea.vmem %s4, %s1811
      $region55: #{tpu_custom_call.1} parent=50 // pred_fallthru
        _
    $region51: #{tpu_custom_call.1} parent=5 // pred_fallthru
      _
  $region6: #{tpu_custom_call.1} parent=0 // loop_footer
    %s14 = sadd.s32 1, %s10
  $region7: #{tpu_custom_call.1} parent=0 // loop_footer_branch
    %9 = sbr.rel target = $region3
  $region8: #{tpu_custom_call.1} parent=0 // loop_exit
    _

</llo_original>
